<compile_context>
chip_gen: v7x
topology: tpu7x:2x2x1
jax: 0.10.0
libtpu: 0.0.40
codegen_flags: <defaults>
</compile_context>

<pallas_src>
import jax
import jax.numpy as jnp
from jax import lax
from jax.experimental import pallas as pl
from jax.experimental.pallas import tpu as pltpu

NEG_SLOPE = 0.01  # PyTorch nn.LeakyReLU default negative_slope


# ----------------------------------------------------------------------------
# Fused kernel (one grid step per batch element)
# ----------------------------------------------------------------------------
def _upde_kernel(latt_ref, infr_ref, wt_ref, bt_ref, w1_ref, b1_ref,
                 w2_ref, b2_ref, w3_ref, b3_ref, out_ref, pad1, pad3):
    # latt_ref: (1, H2, 2*W*Cin)  host-interleaved ConvTranspose input
    # infr_ref: (1, H2, WC)       WC = W2*Cout (lane-packed)
    # wt_ref  : (2*W*Cin, WC)     ConvTranspose2d(2,2) block weight
    # w1/w2   : (3, WC, WC)       banded 3x3 conv weights (taps + W-padding)
    # w3_ref  : (3, 2*WC, WC)     banded 3x3 conv over cat(z, infr)
    # b*_ref  : (1, WC)
    # out_ref : (1, H2, WC)
    # pad1    : VMEM (H2+2, WC)   scratch, 1-row zero halo top/bottom
    # pad3    : VMEM (H2+2, 2*WC) scratch
    _, H2, WC = out_ref.shape

    # Zero only the halo rows; interiors are fully rewritten every grid step,
    # so this stays correct when the batch axis is split across TensorCores.
    pad1[pl.ds(0, 1), :] = jnp.zeros((1, WC), jnp.float32)
    pad1[pl.ds(H2 + 1, 1), :] = jnp.zeros((1, WC), jnp.float32)
    pad3[pl.ds(0, 1), :] = jnp.zeros((1, 2 * WC), jnp.float32)
    pad3[pl.ds(H2 + 1, 1), :] = jnp.zeros((1, 2 * WC), jnp.float32)

    def band_conv(src_ref, w_ref, b_ref):
        # "same" 3x3 conv == 3 dense matmuls over row-shifted slices.
        acc = jnp.dot(src_ref[pl.ds(0, H2), :], w_ref[0],
                      preferred_element_type=jnp.float32) + b_ref[...]
        for di in (1, 2):
            acc = acc + jnp.dot(src_ref[pl.ds(di, H2), :], w_ref[di],
                                preferred_element_type=jnp.float32)
        return acc

    # ConvTranspose2d(kernel=2, stride=2): one lane-dense matmul.
    y = jnp.dot(latt_ref[0], wt_ref[...],
                preferred_element_type=jnp.float32) + bt_ref[...]
    pad1[pl.ds(1, H2), :] = y

    # Conv3x3 + LeakyReLU
    z = band_conv(pad1, w1_ref, b1_ref)
    z = jnp.where(z > 0, z, NEG_SLOPE * z)
    pad1[pl.ds(1, H2), :] = z

    # Conv3x3  (== `x` in the PyTorch forward)
    z = band_conv(pad1, w2_ref, b2_ref)

    # Final Conv3x3 over concat([x, infr], channel): pack side by side in lanes
    # (first WC lanes = x, next WC lanes = infr) -> single 2C-deep conv.
    pad3[pl.ds(1, H2), pl.ds(0, WC)] = z
    pad3[pl.ds(1, H2), pl.ds(WC, WC)] = infr_ref[0]
    out_ref[0] = band_conv(pad3, w3_ref, b3_ref)


# ----------------------------------------------------------------------------
# Host-side weight packing (exact: gathers / selects only, no matmul rounding)
# ----------------------------------------------------------------------------
def _band_conv_weight(w_torch, width):
    """PyTorch (out_ch, in_ch, 3, 3) conv weight -> (3, width*in_ch, width*out_ch)
    banded matrices folding the 3 width taps and 'same' zero padding along W."""
    in_ch, out_ch = w_torch.shape[1], w_torch.shape[0]
    dj = jnp.arange(width)[:, None] - jnp.arange(width)[None, :] + 1   # (w', w)
    valid = (dj >= 0) & (dj <= 2)
    g = w_torch[:, :, :, jnp.clip(dj, 0, 2)]          # (o, c, di, w', w)
    g = jnp.transpose(g, (2, 3, 1, 4, 0))             # (di, w', c, w, o)
    g = jnp.where(valid[None, :, None, :, None], g, 0.0)
    return g.reshape(3, width * in_ch, width * out_ch)


def _convt_block_weight(wt_torch, w_in, w_out):
    """PyTorch ConvTranspose2d weight (in_c, out_c, 2, 2) -> block matrix
    (2*w_in*in_c, w_out*out_c): row (ki, j, c) -> col (w=2j+kj, o)."""
    in_c, out_c = wt_torch.shape[0], wt_torch.shape[1]
    kj_of_w = jnp.arange(w_out) % 2
    g = wt_torch[:, :, :, kj_of_w]                    # (c, o, ki, w)
    g = jnp.transpose(g, (2, 0, 3, 1))                # (ki, c, w, o)
    jmatch = jnp.arange(w_in)[:, None] == (jnp.arange(w_out)[None, :] // 2)
    g = jnp.where(jmatch[None, :, None, :, None], g[:, None], 0.0)  # (ki,j,c,w,o)
    return g.reshape(2 * w_in * in_c, w_out * out_c)


# ----------------------------------------------------------------------------
# Wrapper (NCHW in / NCHW out, PyTorch weight layouts)
# ----------------------------------------------------------------------------
def upde_forward(infr, latt, params):
    B, in_c, H, W = latt.shape
    out_c = params["wt"].shape[1]
    H2, W2 = 2 * H, 2 * W
    WC = W2 * out_c                       # packed lane width (128 in the demo)
    lat_lanes = 2 * W * in_c
    f32 = jnp.float32

    # --- activation packing (layout glue: NCHW -> rows x (w*C + c) lanes) ----
    infr_p = jnp.transpose(infr, (0, 2, 3, 1)).reshape(B, H2, WC).astype(f32)

    latt_p = jnp.transpose(latt, (0, 2, 3, 1)).reshape(B, H, W * in_c).astype(f32)
    # interleave/expand: row 2i+ki holds latt row i in lane-block ki (zeros
    # elsewhere) so the transposed conv is a single matmul in-kernel.
    le = jnp.zeros((B, H, 2, 2, W * in_c), f32)
    le = le.at[:, :, 0, 0].set(latt_p).at[:, :, 1, 1].set(latt_p)
    latt_x = le.reshape(B, H2, lat_lanes)

    # --- weight packing -------------------------------------------------------
    wt_blk = _convt_block_weight(params["wt"].astype(f32), W, W2)   # (lat_lanes, WC)
    w1_b = _band_conv_weight(params["w1"].astype(f32), W2)          # (3, WC, WC)
    w2_b = _band_conv_weight(params["w2"].astype(f32), W2)          # (3, WC, WC)
    w3 = params["w3"].astype(f32)
    w3_b = jnp.concatenate(                                         # (3, 2*WC, WC)
        [_band_conv_weight(w3[:, :out_c], W2),    # x half  (cat order: x first)
         _band_conv_weight(w3[:, out_c:], W2)],   # infr half
        axis=1)
    bt_r = jnp.tile(params["bt"].astype(f32), W2).reshape(1, WC)
    b1_r = jnp.tile(params["b1"].astype(f32), W2).reshape(1, WC)
    b2_r = jnp.tile(params["b2"].astype(f32), W2).reshape(1, WC)
    b3_r = jnp.tile(params["b3"].astype(f32), W2).reshape(1, WC)

    out_p = pl.pallas_call(
        _upde_kernel,
        out_shape=jax.ShapeDtypeStruct((B, H2, WC), f32),
        grid=(B,),
        in_specs=[
            pl.BlockSpec((1, H2, lat_lanes), lambda b: (b, 0, 0)),
            pl.BlockSpec((1, H2, WC), lambda b: (b, 0, 0)),
            pl.BlockSpec((lat_lanes, WC), lambda b: (0, 0)),
            pl.BlockSpec((1, WC), lambda b: (0, 0)),
            pl.BlockSpec((3, WC, WC), lambda b: (0, 0, 0)),
            pl.BlockSpec((1, WC), lambda b: (0, 0)),
            pl.BlockSpec((3, WC, WC), lambda b: (0, 0, 0)),
            pl.BlockSpec((1, WC), lambda b: (0, 0)),
            pl.BlockSpec((3, 2 * WC, WC), lambda b: (0, 0, 0)),
            pl.BlockSpec((1, WC), lambda b: (0, 0)),
        ],
        out_specs=pl.BlockSpec((1, H2, WC), lambda b: (b, 0, 0)),
        scratch_shapes=[pltpu.VMEM((H2 + 2, WC), f32),
                        pltpu.VMEM((H2 + 2, 2 * WC), f32)],
        compiler_params=pltpu.CompilerParams(dimension_semantics=("parallel",)),
    )(latt_x, infr_p, wt_blk, bt_r, w1_b, b1_r, w2_b, b2_r, w3_b, b3_r)

    out = out_p.reshape(B, H2, W2, out_c)
    return jnp.transpose(out, (0, 3, 1, 2))   # back to NCHW


# ----------------------------------------------------------------------------
# Pure-JAX reference (for correctness check)
# ----------------------------------------------------------------------------
def upde_reference(infr, latt, params):
    x = jnp.transpose(latt, (0, 2, 3, 1))                    # NHWC
    wt = jnp.transpose(params["wt"], (2, 3, 0, 1))            # (2,2,in_c,out_c)
    B, H, W, _ = x.shape
    Cout = wt.shape[-1]
    t = jnp.einsum("bhwc,ijco->bhiwjo", x, wt)
    y = t.reshape(B, 2 * H, 2 * W, Cout) + params["bt"]

    def conv3x3(z, w, b):
        wj = jnp.transpose(w, (2, 3, 1, 0))                   # HWIO
        return lax.conv_general_dilated(
            z, wj, window_strides=(1, 1), padding=((1, 1), (1, 1)),
            dimension_numbers=("NHWC", "HWIO", "NHWC")) + b

    z = conv3x3(y, params["w1"], params["b1"])
    z = jnp.where(z > 0, z, NEG_SLOPE * z)
    z = conv3x3(z, params["w2"], params["b2"])
    cat = jnp.concatenate([z, jnp.transpose(infr, (0, 2, 3, 1))], axis=-1)
    out = conv3x3(cat, params["w3"], params["b3"])
    return jnp.transpose(out, (0, 3, 1, 2))


if __name__ == "__main__":
    B, in_c, out_c, H, W = 2, 4, 4, 16, 16
    key = jax.random.PRNGKey(0)
    ks = jax.random.split(key, 10)

    params = {
        "wt": 0.1 * jax.random.normal(ks[0], (in_c, out_c, 2, 2), jnp.float32),
        "bt": 0.1 * jax.random.normal(ks[1], (out_c,), jnp.float32),
        "w1": 0.1 * jax.random.normal(ks[2], (out_c, out_c, 3, 3), jnp.float32),
        "b1": 0.1 * jax.random.normal(ks[3], (out_c,), jnp.float32),
        "w2": 0.1 * jax.random.normal(ks[4], (out_c, out_c, 3, 3), jnp.float32),
        "b2": 0.1 * jax.random.normal(ks[5], (out_c,), jnp.float32),
        "w3": 0.1 * jax.random.normal(ks[6], (out_c, 2 * out_c, 3, 3), jnp.float32),
        "b3": 0.1 * jax.random.normal(ks[7], (out_c,), jnp.float32),
    }
    latt = jax.random.normal(ks[8], (B, in_c, H, W), jnp.float32)
    infr = jax.random.normal(ks[9], (B, out_c, 2 * H, 2 * W), jnp.float32)

    out = jax.jit(upde_forward)(infr, latt, params)
    out = jax.block_until_ready(out)

    assert out.shape == (B, out_c, 2 * H, 2 * W), out.shape
    ref = upde_reference(infr, latt, params)
    assert jnp.allclose(out, ref, atol=1e-4, rtol=1e-4), (
        float(jnp.max(jnp.abs(out - ref))))
    print("KERNEL_OK")
</pallas_src>

<mosaic_0001>
module attributes {stable_mosaic.version = 11 : i64} {
  func.func @_upde_kernel(%arg0: i32, %arg1: memref<1x32x128xf32, #tpu.memory_space<vmem>>, %arg2: memref<1x32x128xf32, #tpu.memory_space<vmem>>, %arg3: memref<128x128xf32, #tpu.memory_space<vmem>>, %arg4: memref<1x128xf32, #tpu.memory_space<vmem>>, %arg5: memref<3x128x128xf32, #tpu.memory_space<vmem>>, %arg6: memref<1x128xf32, #tpu.memory_space<vmem>>, %arg7: memref<3x128x128xf32, #tpu.memory_space<vmem>>, %arg8: memref<1x128xf32, #tpu.memory_space<vmem>>, %arg9: memref<3x256x128xf32, #tpu.memory_space<vmem>>, %arg10: memref<1x128xf32, #tpu.memory_space<vmem>>, %arg11: memref<1x32x128xf32, #tpu.memory_space<vmem>>, %arg12: memref<34x128xf32, #tpu.memory_space<vmem>>, %arg13: memref<34x256xf32, #tpu.memory_space<vmem>>) attributes {dimension_semantics = [#tpu.dimension_semantics<parallel>], iteration_bounds = array<i64: 2>, scalar_prefetch = 0 : i64, scratch_operands = 2 : i64, tpu.core_type = #tpu.core_type<tc>, window_params = [{transform_indices = @transform_0, window_bounds = array<i64: 1, 32, 128>}, {transform_indices = @transform_1, window_bounds = array<i64: 1, 32, 128>}, {pipeline_mode = #tpu.pipeline_mode<synchronous>, transform_indices = @transform_2, window_bounds = array<i64: 128, 128>}, {pipeline_mode = #tpu.pipeline_mode<synchronous>, transform_indices = @transform_3, window_bounds = array<i64: 1, 128>}, {pipeline_mode = #tpu.pipeline_mode<synchronous>, transform_indices = @transform_4, window_bounds = array<i64: 3, 128, 128>}, {pipeline_mode = #tpu.pipeline_mode<synchronous>, transform_indices = @transform_5, window_bounds = array<i64: 1, 128>}, {pipeline_mode = #tpu.pipeline_mode<synchronous>, transform_indices = @transform_6, window_bounds = array<i64: 3, 128, 128>}, {pipeline_mode = #tpu.pipeline_mode<synchronous>, transform_indices = @transform_7, window_bounds = array<i64: 1, 128>}, {pipeline_mode = #tpu.pipeline_mode<synchronous>, transform_indices = @transform_8, window_bounds = array<i64: 3, 256, 128>}, {pipeline_mode = #tpu.pipeline_mode<synchronous>, transform_indices = @transform_9, window_bounds = array<i64: 1, 128>}, {transform_indices = @transform_10, window_bounds = array<i64: 1, 32, 128>}]} {
    %cst = arith.constant 0.000000e+00 : f32
    %0 = vector.broadcast %cst : f32 to vector<1x128xf32>
    %c0 = arith.constant 0 : index
    %c0_0 = arith.constant 0 : index
    %1 = vector.load %arg12[%c0, %c0_0] : memref<34x128xf32, #tpu.memory_space<vmem>>, vector<1x128xf32>
    tpu.vector_store %arg12[%c0, %c0_0], %0 {strides = array<i32>} : memref<34x128xf32, #tpu.memory_space<vmem>>, vector<1x128xf32>,
    %cst_1 = arith.constant 0.000000e+00 : f32
    %2 = vector.broadcast %cst_1 : f32 to vector<1x128xf32>
    %c33 = arith.constant 33 : index
    %c0_2 = arith.constant 0 : index
    %3 = vector.load %arg12[%c33, %c0_2] : memref<34x128xf32, #tpu.memory_space<vmem>>, vector<1x128xf32>
    tpu.vector_store %arg12[%c33, %c0_2], %2 {strides = array<i32>} : memref<34x128xf32, #tpu.memory_space<vmem>>, vector<1x128xf32>,
    %cst_3 = arith.constant 0.000000e+00 : f32
    %4 = vector.broadcast %cst_3 : f32 to vector<1x256xf32>
    %c0_4 = arith.constant 0 : index
    %c0_5 = arith.constant 0 : index
    %5 = vector.load %arg13[%c0_4, %c0_5] : memref<34x256xf32, #tpu.memory_space<vmem>>, vector<1x256xf32>
    tpu.vector_store %arg13[%c0_4, %c0_5], %4 {strides = array<i32>} : memref<34x256xf32, #tpu.memory_space<vmem>>, vector<1x256xf32>,
    %cst_6 = arith.constant 0.000000e+00 : f32
    %6 = vector.broadcast %cst_6 : f32 to vector<1x256xf32>
    %c33_7 = arith.constant 33 : index
    %c0_8 = arith.constant 0 : index
    %7 = vector.load %arg13[%c33_7, %c0_8] : memref<34x256xf32, #tpu.memory_space<vmem>>, vector<1x256xf32>
    tpu.vector_store %arg13[%c33_7, %c0_8], %6 {strides = array<i32>} : memref<34x256xf32, #tpu.memory_space<vmem>>, vector<1x256xf32>,
    %c0_9 = arith.constant 0 : index
    %c0_10 = arith.constant 0 : index
    %c0_11 = arith.constant 0 : index
    %8 = vector.load %arg1[%c0_9, %c0_10, %c0_11] : memref<1x32x128xf32, #tpu.memory_space<vmem>>, vector<1x32x128xf32>
    %9 = vector.shape_cast %8 : vector<1x32x128xf32> to vector<32x128xf32>
    %c0_12 = arith.constant 0 : index
    %c0_13 = arith.constant 0 : index
    %10 = vector.load %arg3[%c0_12, %c0_13] : memref<128x128xf32, #tpu.memory_space<vmem>>, vector<128x128xf32>
    %cst_14 = arith.constant dense<0.000000e+00> : vector<32x128xf32>
    %11 = tpu.matmul %9, %10, %cst_14 {dimension_numbers = #tpu.dot_dimension_numbers<[1], [0], [0], [1], [0, 0, 1, 1], [], []>} : vector<32x128xf32>, vector<128x128xf32>, vector<32x128xf32> -> vector<32x128xf32>
    %c0_15 = arith.constant 0 : index
    %c0_16 = arith.constant 0 : index
    %12 = vector.load %arg4[%c0_15, %c0_16] : memref<1x128xf32, #tpu.memory_space<vmem>>, vector<1x128xf32>
    %13 = vector.broadcast %12 : vector<1x128xf32> to vector<32x128xf32>
    %14 = arith.addf %11, %13 : vector<32x128xf32>
    %c1 = arith.constant 1 : index
    %c0_17 = arith.constant 0 : index
    %15 = vector.load %arg12[%c1, %c0_17] : memref<34x128xf32, #tpu.memory_space<vmem>>, vector<32x128xf32>
    tpu.vector_store %arg12[%c1, %c0_17], %14 {strides = array<i32>} : memref<34x128xf32, #tpu.memory_space<vmem>>, vector<32x128xf32>,
    %c0_18 = arith.constant 0 : index
    %c0_19 = arith.constant 0 : index
    %16 = vector.load %arg12[%c0_18, %c0_19] : memref<34x128xf32, #tpu.memory_space<vmem>>, vector<32x128xf32>
    %c0_20 = arith.constant 0 : index
    %c0_21 = arith.constant 0 : index
    %c0_22 = arith.constant 0 : index
    %17 = vector.load %arg5[%c0_20, %c0_21, %c0_22] : memref<3x128x128xf32, #tpu.memory_space<vmem>>, vector<1x128x128xf32>
    %18 = vector.shape_cast %17 : vector<1x128x128xf32> to vector<128x128xf32>
    %cst_23 = arith.constant dense<0.000000e+00> : vector<32x128xf32>
    %19 = tpu.matmul %16, %18, %cst_23 {dimension_numbers = #tpu.dot_dimension_numbers<[1], [0], [0], [1], [0, 0, 1, 1], [], []>} : vector<32x128xf32>, vector<128x128xf32>, vector<32x128xf32> -> vector<32x128xf32>
    %c0_24 = arith.constant 0 : index
    %c0_25 = arith.constant 0 : index
    %20 = vector.load %arg6[%c0_24, %c0_25] : memref<1x128xf32, #tpu.memory_space<vmem>>, vector<1x128xf32>
    %21 = vector.broadcast %20 : vector<1x128xf32> to vector<32x128xf32>
    %22 = arith.addf %19, %21 : vector<32x128xf32>
    %c1_26 = arith.constant 1 : index
    %c0_27 = arith.constant 0 : index
    %23 = vector.load %arg12[%c1_26, %c0_27] : memref<34x128xf32, #tpu.memory_space<vmem>>, vector<32x128xf32>
    %c1_28 = arith.constant 1 : index
    %c0_29 = arith.constant 0 : index
    %c0_30 = arith.constant 0 : index
    %24 = vector.load %arg5[%c1_28, %c0_29, %c0_30] : memref<3x128x128xf32, #tpu.memory_space<vmem>>, vector<1x128x128xf32>
    %25 = vector.shape_cast %24 : vector<1x128x128xf32> to vector<128x128xf32>
    %cst_31 = arith.constant dense<0.000000e+00> : vector<32x128xf32>
    %26 = tpu.matmul %23, %25, %cst_31 {dimension_numbers = #tpu.dot_dimension_numbers<[1], [0], [0], [1], [0, 0, 1, 1], [], []>} : vector<32x128xf32>, vector<128x128xf32>, vector<32x128xf32> -> vector<32x128xf32>
    %27 = arith.addf %22, %26 : vector<32x128xf32>
    %c2 = arith.constant 2 : index
    %c0_32 = arith.constant 0 : index
    %28 = vector.load %arg12[%c2, %c0_32] : memref<34x128xf32, #tpu.memory_space<vmem>>, vector<32x128xf32>
    %c2_33 = arith.constant 2 : index
    %c0_34 = arith.constant 0 : index
    %c0_35 = arith.constant 0 : index
    %29 = vector.load %arg5[%c2_33, %c0_34, %c0_35] : memref<3x128x128xf32, #tpu.memory_space<vmem>>, vector<1x128x128xf32>
    %30 = vector.shape_cast %29 : vector<1x128x128xf32> to vector<128x128xf32>
    %cst_36 = arith.constant dense<0.000000e+00> : vector<32x128xf32>
    %31 = tpu.matmul %28, %30, %cst_36 {dimension_numbers = #tpu.dot_dimension_numbers<[1], [0], [0], [1], [0, 0, 1, 1], [], []>} : vector<32x128xf32>, vector<128x128xf32>, vector<32x128xf32> -> vector<32x128xf32>
    %32 = arith.addf %27, %31 : vector<32x128xf32>
    %cst_37 = arith.constant 0.000000e+00 : f32
    %33 = vector.broadcast %cst_37 : f32 to vector<32x128xf32>
    %34 = arith.cmpf ogt, %32, %33 : vector<32x128xf32>
    %cst_38 = arith.constant 0.00999999977 : f32
    %35 = vector.broadcast %cst_38 : f32 to vector<32x128xf32>
    %36 = arith.mulf %35, %32 : vector<32x128xf32>
    %37 = arith.select %34, %32, %36 : vector<32x128xi1>, vector<32x128xf32>
    %c1_39 = arith.constant 1 : index
    %c0_40 = arith.constant 0 : index
    %38 = vector.load %arg12[%c1_39, %c0_40] : memref<34x128xf32, #tpu.memory_space<vmem>>, vector<32x128xf32>
    tpu.vector_store %arg12[%c1_39, %c0_40], %37 {strides = array<i32>} : memref<34x128xf32, #tpu.memory_space<vmem>>, vector<32x128xf32>,
    %c0_41 = arith.constant 0 : index
    %c0_42 = arith.constant 0 : index
    %39 = vector.load %arg12[%c0_41, %c0_42] : memref<34x128xf32, #tpu.memory_space<vmem>>, vector<32x128xf32>
    %c0_43 = arith.constant 0 : index
    %c0_44 = arith.constant 0 : index
    %c0_45 = arith.constant 0 : index
    %40 = vector.load %arg7[%c0_43, %c0_44, %c0_45] : memref<3x128x128xf32, #tpu.memory_space<vmem>>, vector<1x128x128xf32>
    %41 = vector.shape_cast %40 : vector<1x128x128xf32> to vector<128x128xf32>
    %cst_46 = arith.constant dense<0.000000e+00> : vector<32x128xf32>
    %42 = tpu.matmul %39, %41, %cst_46 {dimension_numbers = #tpu.dot_dimension_numbers<[1], [0], [0], [1], [0, 0, 1, 1], [], []>} : vector<32x128xf32>, vector<128x128xf32>, vector<32x128xf32> -> vector<32x128xf32>
    %c0_47 = arith.constant 0 : index
    %c0_48 = arith.constant 0 : index
    %43 = vector.load %arg8[%c0_47, %c0_48] : memref<1x128xf32, #tpu.memory_space<vmem>>, vector<1x128xf32>
    %44 = vector.broadcast %43 : vector<1x128xf32> to vector<32x128xf32>
    %45 = arith.addf %42, %44 : vector<32x128xf32>
    %c1_49 = arith.constant 1 : index
    %c0_50 = arith.constant 0 : index
    %46 = vector.load %arg12[%c1_49, %c0_50] : memref<34x128xf32, #tpu.memory_space<vmem>>, vector<32x128xf32>
    %c1_51 = arith.constant 1 : index
    %c0_52 = arith.constant 0 : index
    %c0_53 = arith.constant 0 : index
    %47 = vector.load %arg7[%c1_51, %c0_52, %c0_53] : memref<3x128x128xf32, #tpu.memory_space<vmem>>, vector<1x128x128xf32>
    %48 = vector.shape_cast %47 : vector<1x128x128xf32> to vector<128x128xf32>
    %cst_54 = arith.constant dense<0.000000e+00> : vector<32x128xf32>
    %49 = tpu.matmul %46, %48, %cst_54 {dimension_numbers = #tpu.dot_dimension_numbers<[1], [0], [0], [1], [0, 0, 1, 1], [], []>} : vector<32x128xf32>, vector<128x128xf32>, vector<32x128xf32> -> vector<32x128xf32>
    %50 = arith.addf %45, %49 : vector<32x128xf32>
    %c2_55 = arith.constant 2 : index
    %c0_56 = arith.constant 0 : index
    %51 = vector.load %arg12[%c2_55, %c0_56] : memref<34x128xf32, #tpu.memory_space<vmem>>, vector<32x128xf32>
    %c2_57 = arith.constant 2 : index
    %c0_58 = arith.constant 0 : index
    %c0_59 = arith.constant 0 : index
    %52 = vector.load %arg7[%c2_57, %c0_58, %c0_59] : memref<3x128x128xf32, #tpu.memory_space<vmem>>, vector<1x128x128xf32>
    %53 = vector.shape_cast %52 : vector<1x128x128xf32> to vector<128x128xf32>
    %cst_60 = arith.constant dense<0.000000e+00> : vector<32x128xf32>
    %54 = tpu.matmul %51, %53, %cst_60 {dimension_numbers = #tpu.dot_dimension_numbers<[1], [0], [0], [1], [0, 0, 1, 1], [], []>} : vector<32x128xf32>, vector<128x128xf32>, vector<32x128xf32> -> vector<32x128xf32>
    %55 = arith.addf %50, %54 : vector<32x128xf32>
    %c1_61 = arith.constant 1 : index
    %c0_62 = arith.constant 0 : index
    %56 = vector.load %arg13[%c1_61, %c0_62] : memref<34x256xf32, #tpu.memory_space<vmem>>, vector<32x128xf32>
    tpu.vector_store %arg13[%c1_61, %c0_62], %55 {strides = array<i32>} : memref<34x256xf32, #tpu.memory_space<vmem>>, vector<32x128xf32>,
    %c0_63 = arith.constant 0 : index
    %c0_64 = arith.constant 0 : index
    %c0_65 = arith.constant 0 : index
    %57 = vector.load %arg2[%c0_63, %c0_64, %c0_65] : memref<1x32x128xf32, #tpu.memory_space<vmem>>, vector<1x32x128xf32>
    %58 = vector.shape_cast %57 : vector<1x32x128xf32> to vector<32x128xf32>
    %c1_66 = arith.constant 1 : index
    %c128 = arith.constant 128 : index
    %59 = vector.load %arg13[%c1_66, %c128] : memref<34x256xf32, #tpu.memory_space<vmem>>, vector<32x128xf32>
    tpu.vector_store %arg13[%c1_66, %c128], %58 {strides = array<i32>} : memref<34x256xf32, #tpu.memory_space<vmem>>, vector<32x128xf32>,
    %c0_67 = arith.constant 0 : index
    %c0_68 = arith.constant 0 : index
    %60 = vector.load %arg13[%c0_67, %c0_68] : memref<34x256xf32, #tpu.memory_space<vmem>>, vector<32x256xf32>
    %c0_69 = arith.constant 0 : index
    %c0_70 = arith.constant 0 : index
    %c0_71 = arith.constant 0 : index
    %61 = vector.load %arg9[%c0_69, %c0_70, %c0_71] : memref<3x256x128xf32, #tpu.memory_space<vmem>>, vector<1x256x128xf32>
    %62 = vector.shape_cast %61 : vector<1x256x128xf32> to vector<256x128xf32>
    %cst_72 = arith.constant dense<0.000000e+00> : vector<32x128xf32>
    %63 = tpu.matmul %60, %62, %cst_72 {dimension_numbers = #tpu.dot_dimension_numbers<[1], [0], [0], [1], [0, 0, 1, 1], [], []>} : vector<32x256xf32>, vector<256x128xf32>, vector<32x128xf32> -> vector<32x128xf32>
    %c0_73 = arith.constant 0 : index
    %c0_74 = arith.constant 0 : index
    %64 = vector.load %arg10[%c0_73, %c0_74] : memref<1x128xf32, #tpu.memory_space<vmem>>, vector<1x128xf32>
    %65 = vector.broadcast %64 : vector<1x128xf32> to vector<32x128xf32>
    %66 = arith.addf %63, %65 : vector<32x128xf32>
    %c1_75 = arith.constant 1 : index
    %c0_76 = arith.constant 0 : index
    %67 = vector.load %arg13[%c1_75, %c0_76] : memref<34x256xf32, #tpu.memory_space<vmem>>, vector<32x256xf32>
    %c1_77 = arith.constant 1 : index
    %c0_78 = arith.constant 0 : index
    %c0_79 = arith.constant 0 : index
    %68 = vector.load %arg9[%c1_77, %c0_78, %c0_79] : memref<3x256x128xf32, #tpu.memory_space<vmem>>, vector<1x256x128xf32>
    %69 = vector.shape_cast %68 : vector<1x256x128xf32> to vector<256x128xf32>
    %cst_80 = arith.constant dense<0.000000e+00> : vector<32x128xf32>
    %70 = tpu.matmul %67, %69, %cst_80 {dimension_numbers = #tpu.dot_dimension_numbers<[1], [0], [0], [1], [0, 0, 1, 1], [], []>} : vector<32x256xf32>, vector<256x128xf32>, vector<32x128xf32> -> vector<32x128xf32>
    %71 = arith.addf %66, %70 : vector<32x128xf32>
    %c2_81 = arith.constant 2 : index
    %c0_82 = arith.constant 0 : index
    %72 = vector.load %arg13[%c2_81, %c0_82] : memref<34x256xf32, #tpu.memory_space<vmem>>, vector<32x256xf32>
    %c2_83 = arith.constant 2 : index
    %c0_84 = arith.constant 0 : index
    %c0_85 = arith.constant 0 : index
    %73 = vector.load %arg9[%c2_83, %c0_84, %c0_85] : memref<3x256x128xf32, #tpu.memory_space<vmem>>, vector<1x256x128xf32>
    %74 = vector.shape_cast %73 : vector<1x256x128xf32> to vector<256x128xf32>
    %cst_86 = arith.constant dense<0.000000e+00> : vector<32x128xf32>
    %75 = tpu.matmul %72, %74, %cst_86 {dimension_numbers = #tpu.dot_dimension_numbers<[1], [0], [0], [1], [0, 0, 1, 1], [], []>} : vector<32x256xf32>, vector<256x128xf32>, vector<32x128xf32> -> vector<32x128xf32>
    %76 = arith.addf %71, %75 : vector<32x128xf32>
    %c0_87 = arith.constant 0 : index
    %c0_88 = arith.constant 0 : index
    %c0_89 = arith.constant 0 : index
    %77 = vector.load %arg11[%c0_87, %c0_88, %c0_89] : memref<1x32x128xf32, #tpu.memory_space<vmem>>, vector<1x32x128xf32>
    %78 = vector.shape_cast %77 : vector<1x32x128xf32> to vector<32x128xf32>
    %79 = vector.shape_cast %76 : vector<32x128xf32> to vector<1x32x128xf32>
    tpu.vector_store %arg11[%c0_87, %c0_88, %c0_89], %79 {strides = array<i32>} : memref<1x32x128xf32, #tpu.memory_space<vmem>>, vector<1x32x128xf32>,
    return
  }
  func.func @transform_0(%arg0: i32) -> (i32, i32, i32) {
    %c0_i32 = arith.constant 0 : i32
    %c0_i32_0 = arith.constant 0 : i32
    %c0_i32_1 = arith.constant 0 : i32
    return %arg0, %c0_i32, %c0_i32_0 : i32, i32, i32
  }
  func.func @transform_1(%arg0: i32) -> (i32, i32, i32) {
    %c0_i32 = arith.constant 0 : i32
    %c0_i32_0 = arith.constant 0 : i32
    %c0_i32_1 = arith.constant 0 : i32
    return %arg0, %c0_i32, %c0_i32_0 : i32, i32, i32
  }
  func.func @transform_2(%arg0: i32) -> (i32, i32) {
    %c0_i32 = arith.constant 0 : i32
    %c0_i32_0 = arith.constant 0 : i32
    %c0_i32_1 = arith.constant 0 : i32
    return %c0_i32, %c0_i32_0 : i32, i32
  }
  func.func @transform_3(%arg0: i32) -> (i32, i32) {
    %c0_i32 = arith.constant 0 : i32
    %c0_i32_0 = arith.constant 0 : i32
    %c0_i32_1 = arith.constant 0 : i32
    return %c0_i32, %c0_i32_0 : i32, i32
  }
  func.func @transform_4(%arg0: i32) -> (i32, i32, i32) {
    %c0_i32 = arith.constant 0 : i32
    %c0_i32_0 = arith.constant 0 : i32
    %c0_i32_1 = arith.constant 0 : i32
    %c0_i32_2 = arith.constant 0 : i32
    return %c0_i32, %c0_i32_0, %c0_i32_1 : i32, i32, i32
  }
  func.func @transform_5(%arg0: i32) -> (i32, i32) {
    %c0_i32 = arith.constant 0 : i32
    %c0_i32_0 = arith.constant 0 : i32
    %c0_i32_1 = arith.constant 0 : i32
    return %c0_i32, %c0_i32_0 : i32, i32
  }
  func.func @transform_6(%arg0: i32) -> (i32, i32, i32) {
    %c0_i32 = arith.constant 0 : i32
    %c0_i32_0 = arith.constant 0 : i32
    %c0_i32_1 = arith.constant 0 : i32
    %c0_i32_2 = arith.constant 0 : i32
    return %c0_i32, %c0_i32_0, %c0_i32_1 : i32, i32, i32
  }
  func.func @transform_7(%arg0: i32) -> (i32, i32) {
    %c0_i32 = arith.constant 0 : i32
    %c0_i32_0 = arith.constant 0 : i32
    %c0_i32_1 = arith.constant 0 : i32
    return %c0_i32, %c0_i32_0 : i32, i32
  }
  func.func @transform_8(%arg0: i32) -> (i32, i32, i32) {
    %c0_i32 = arith.constant 0 : i32
    %c0_i32_0 = arith.constant 0 : i32
    %c0_i32_1 = arith.constant 0 : i32
    %c0_i32_2 = arith.constant 0 : i32
    return %c0_i32, %c0_i32_0, %c0_i32_1 : i32, i32, i32
  }
  func.func @transform_9(%arg0: i32) -> (i32, i32) {
    %c0_i32 = arith.constant 0 : i32
    %c0_i32_0 = arith.constant 0 : i32
    %c0_i32_1 = arith.constant 0 : i32
    return %c0_i32, %c0_i32_0 : i32, i32
  }
  func.func @transform_10(%arg0: i32) -> (i32, i32, i32) {
    %c0_i32 = arith.constant 0 : i32
    %c0_i32_0 = arith.constant 0 : i32
    %c0_i32_1 = arith.constant 0 : i32
    return %arg0, %c0_i32, %c0_i32_0 : i32, i32, i32
  }
}

</mosaic_0001>

<llo_original>
// kernel: tile.23
$region0: #{tile.23}
  #allocation0 [shape = 's32[1]{0}', space=sflag, size = 0x4, scoped, tag = 'scoped memory for tile.23']
  %s0 = inlined_call_operand.vmem [shape: f32[4], index: 0, kind: input, shape index: {}]
  %s1 = inlined_call_operand.vmem [shape: f32[32,4], index: 1, kind: output, shape index: {}]
  // Predicated region
  $region2: #{tile.23} parent=0 // pred_check
    _
  $region3: #{tile.23} parent=0 // pred_check_branch
    %3 = sbr.rel (0) target = $region5
  $region4: #{tile.23} parent=0 // pred_region
    _
  $region5: #{tile.23} parent=0 // pred_fallthru
    _
  %v4 = vld [vmem:[%s0] ss:$0 sm:$0xff]
  %5 = vst [vmem:[%s1] sm:$0xff] %v4
  %s6 = scalar_lea.vmem %s1, 8
  %7 = vst [vmem:[%s6] sm:$0xff] %v4
  %s8 = scalar_lea.vmem %s1, 16
  %9 = vst [vmem:[%s8] sm:$0xff] %v4
  %s10 = scalar_lea.vmem %s1, 24
  %11 = vst [vmem:[%s10] sm:$0xff] %v4

// kernel: tile.24
$region0: #{tile.24}
  %s0 = inlined_call_operand.vmem [shape: f32[32,4], index: 0, kind: input, shape index: {}]
  %s1 = inlined_call_operand.vmem [shape: f32[1,128], index: 1, kind: output, shape index: {}]
  $region1: #{tile.24} parent=0
    #allocation0 [shape = 'u8[4096]{0}', space=vmem, size = 0x1000, scoped, tag = 'scoped mem for output reshape']
    %v2 = vld [vmem:[%s0] sm:$0x1]
    %vm3 = vcmask 31744
    %4 = vst.msk [vmem:[#allocation0] sm:$0x1] %vm3, %v2
    %s5 = scalar_lea.vmem %s0, 31
    %v6 = vld [vmem:[%s5] sm:$0x1]
    %7 = vrot.lane.b32.xlu0 %v6, 124
    %v8 = vpop.permute.xlu0 %7
    %vm9 = vcmask 1048544
    %10 = vst.msk [vmem:[#allocation0] sm:$0x1] %vm9, %v8
    %s11 = scalar_lea.vmem %s0, 30
    %v12 = vld [vmem:[%s11] sm:$0x1]
    %13 = vrot.lane.b32.xlu0 %v12, 120
    %v14 = vpop.permute.xlu0 %13
    %vm15 = vcmask 1015744
    %16 = vst.msk [vmem:[#allocation0] sm:$0x1] %vm15, %v14
    %s17 = scalar_lea.vmem %s0, 29
    %v18 = vld [vmem:[%s17] sm:$0x1]
    %19 = vrot.lane.b32.xlu0 %v18, 116
    %v20 = vpop.permute.xlu0 %19
    %vm21 = vcmask 982944
    %22 = vst.msk [vmem:[#allocation0] sm:$0x1] %vm21, %v20
    %s23 = scalar_lea.vmem %s0, 28
    %v24 = vld [vmem:[%s23] sm:$0x1]
    %25 = vrot.lane.b32.xlu0 %v24, 112
    %v26 = vpop.permute.xlu0 %25
    %vm27 = vcmask 950144
    %28 = vst.msk [vmem:[#allocation0] sm:$0x1] %vm27, %v26
    %s29 = scalar_lea.vmem %s0, 27
    %v30 = vld [vmem:[%s29] sm:$0x1]
    %31 = vrot.lane.b32.xlu0 %v30, 108
    %v32 = vpop.permute.xlu0 %31
    %vm33 = vcmask 917344
    %34 = vst.msk [vmem:[#allocation0] sm:$0x1] %vm33, %v32
    %s35 = scalar_lea.vmem %s0, 26
    %v36 = vld [vmem:[%s35] sm:$0x1]
    %37 = vrot.lane.b32.xlu0 %v36, 104
    %v38 = vpop.permute.xlu0 %37
    %vm39 = vcmask 884544
    %40 = vst.msk [vmem:[#allocation0] sm:$0x1] %vm39, %v38
    %s41 = scalar_lea.vmem %s0, 25
    %v42 = vld [vmem:[%s41] sm:$0x1]
    %43 = vrot.lane.b32.xlu0 %v42, 100
    %v44 = vpop.permute.xlu0 %43
    %vm45 = vcmask 851744
    %46 = vst.msk [vmem:[#allocation0] sm:$0x1] %vm45, %v44
    %s47 = scalar_lea.vmem %s0, 24
    %v48 = vld [vmem:[%s47] sm:$0x1]
    %49 = vrot.lane.b32.xlu0 %v48, 96
    %v50 = vpop.permute.xlu0 %49
    %vm51 = vcmask 818944
    %52 = vst.msk [vmem:[#allocation0] sm:$0x1] %vm51, %v50
    %s53 = scalar_lea.vmem %s0, 23
    %v54 = vld [vmem:[%s53] sm:$0x1]
    %55 = vrot.lane.b32.xlu0 %v54, 92
    %v56 = vpop.permute.xlu0 %55
    %vm57 = vcmask 786144
    %58 = vst.msk [vmem:[#allocation0] sm:$0x1] %vm57, %v56
    %s59 = scalar_lea.vmem %s0, 22
    %v60 = vld [vmem:[%s59] sm:$0x1]
    %61 = vrot.lane.b32.xlu0 %v60, 88
    %v62 = vpop.permute.xlu0 %61
    %vm63 = vcmask 753344
    %64 = vst.msk [vmem:[#allocation0] sm:$0x1] %vm63, %v62
    %s65 = scalar_lea.vmem %s0, 21
    %v66 = vld [vmem:[%s65] sm:$0x1]
    %67 = vrot.lane.b32.xlu0 %v66, 84
    %v68 = vpop.permute.xlu0 %67
    %vm69 = vcmask 720544
    %70 = vst.msk [vmem:[#allocation0] sm:$0x1] %vm69, %v68
    %s71 = scalar_lea.vmem %s0, 20
    %v72 = vld [vmem:[%s71] sm:$0x1]
    %73 = vrot.lane.b32.xlu0 %v72, 80
    %v74 = vpop.permute.xlu0 %73
    %vm75 = vcmask 687744
    %76 = vst.msk [vmem:[#allocation0] sm:$0x1] %vm75, %v74
    %s77 = scalar_lea.vmem %s0, 19
    %v78 = vld [vmem:[%s77] sm:$0x1]
    %79 = vrot.lane.b32.xlu0 %v78, 76
    %v80 = vpop.permute.xlu0 %79
    %vm81 = vcmask 654944
    %82 = vst.msk [vmem:[#allocation0] sm:$0x1] %vm81, %v80
    %s83 = scalar_lea.vmem %s0, 18
    %v84 = vld [vmem:[%s83] sm:$0x1]
    %85 = vrot.lane.b32.xlu0 %v84, 72
    %v86 = vpop.permute.xlu0 %85
    %vm87 = vcmask 622144
    %88 = vst.msk [vmem:[#allocation0] sm:$0x1] %vm87, %v86
    %s89 = scalar_lea.vmem %s0, 17
    %v90 = vld [vmem:[%s89] sm:$0x1]
    %91 = vrot.lane.b32.xlu0 %v90, 68
    %v92 = vpop.permute.xlu0 %91
    %vm93 = vcmask 589344
    %94 = vst.msk [vmem:[#allocation0] sm:$0x1] %vm93, %v92
    %s95 = scalar_lea.vmem %s0, 16
    %v96 = vld [vmem:[%s95] sm:$0x1]
    %97 = vrot.lane.b32.xlu0 %v96, 64
    %v98 = vpop.permute.xlu0 %97
    %vm99 = vcmask 556544
    %100 = vst.msk [vmem:[#allocation0] sm:$0x1] %vm99, %v98
    %s101 = scalar_lea.vmem %s0, 15
    %v102 = vld [vmem:[%s101] sm:$0x1]
    %103 = vrot.lane.b32.xlu0 %v102, 60
    %v104 = vpop.permute.xlu0 %103
    %vm105 = vcmask 523744
    %106 = vst.msk [vmem:[#allocation0] sm:$0x1] %vm105, %v104
    %s107 = scalar_lea.vmem %s0, 14
    %v108 = vld [vmem:[%s107] sm:$0x1]
    %109 = vrot.lane.b32.xlu0 %v108, 56
    %v110 = vpop.permute.xlu0 %109
    %vm111 = vcmask 490944
    %112 = vst.msk [vmem:[#allocation0] sm:$0x1] %vm111, %v110
    %s113 = scalar_lea.vmem %s0, 13
    %v114 = vld [vmem:[%s113] sm:$0x1]
    %115 = vrot.lane.b32.xlu0 %v114, 52
    %v116 = vpop.permute.xlu0 %115
    %vm117 = vcmask 458144
    %118 = vst.msk [vmem:[#allocation0] sm:$0x1] %vm117, %v116
    %s119 = scalar_lea.vmem %s0, 12
    %v120 = vld [vmem:[%s119] sm:$0x1]
    %121 = vrot.lane.b32.xlu0 %v120, 48
    %v122 = vpop.permute.xlu0 %121
    %vm123 = vcmask 425344
    %124 = vst.msk [vmem:[#allocation0] sm:$0x1] %vm123, %v122
    %s125 = scalar_lea.vmem %s0, 11
    %v126 = vld [vmem:[%s125] sm:$0x1]
    %127 = vrot.lane.b32.xlu0 %v126, 44
    %v128 = vpop.permute.xlu0 %127
    %vm129 = vcmask 392544
    %130 = vst.msk [vmem:[#allocation0] sm:$0x1] %vm129, %v128
    %s131 = scalar_lea.vmem %s0, 10
    %v132 = vld [vmem:[%s131] sm:$0x1]
    %133 = vrot.lane.b32.xlu0 %v132, 40
    %v134 = vpop.permute.xlu0 %133
    %vm135 = vcmask 359744
    %136 = vst.msk [vmem:[#allocation0] sm:$0x1] %vm135, %v134
    %s137 = scalar_lea.vmem %s0, 9
    %v138 = vld [vmem:[%s137] sm:$0x1]
    %139 = vrot.lane.b32.xlu0 %v138, 36
    %v140 = vpop.permute.xlu0 %139
    %vm141 = vcmask 326944
    %142 = vst.msk [vmem:[#allocation0] sm:$0x1] %vm141, %v140
    %s143 = scalar_lea.vmem %s0, 8
    %v144 = vld [vmem:[%s143] sm:$0x1]
    %145 = vrot.lane.b32.xlu0 %v144, 32
    %v146 = vpop.permute.xlu0 %145
    %vm147 = vcmask 294144
    %148 = vst.msk [vmem:[#allocation0] sm:$0x1] %vm147, %v146
    %s149 = scalar_lea.vmem %s0, 7
    %v150 = vld [vmem:[%s149] sm:$0x1]
    %151 = vrot.lane.b32.xlu0 %v150, 28
    %v152 = vpop.permute.xlu0 %151
    %vm153 = vcmask 261344
    %154 = vst.msk [vmem:[#allocation0] sm:$0x1] %vm153, %v152
    %s155 = scalar_lea.vmem %s0, 6
    %v156 = vld [vmem:[%s155] sm:$0x1]
    %157 = vrot.lane.b32.xlu0 %v156, 24
    %v158 = vpop.permute.xlu0 %157
    %vm159 = vcmask 228544
    %160 = vst.msk [vmem:[#allocation0] sm:$0x1] %vm159, %v158
    %s161 = scalar_lea.vmem %s0, 5
    %v162 = vld [vmem:[%s161] sm:$0x1]
    %163 = vrot.lane.b32.xlu0 %v162, 20
    %v164 = vpop.permute.xlu0 %163
    %vm165 = vcmask 195744
    %166 = vst.msk [vmem:[#allocation0] sm:$0x1] %vm165, %v164
    %s167 = scalar_lea.vmem %s0, 4
    %v168 = vld [vmem:[%s167] sm:$0x1]
    %169 = vrot.lane.b32.xlu0 %v168, 16
    %v170 = vpop.permute.xlu0 %169
    %vm171 = vcmask 162944
    %172 = vst.msk [vmem:[#allocation0] sm:$0x1] %vm171, %v170
    %s173 = scalar_lea.vmem %s0, 3
    %v174 = vld [vmem:[%s173] sm:$0x1]
    %175 = vrot.lane.b32.xlu0 %v174, 12
    %v176 = vpop.permute.xlu0 %175
    %vm177 = vcmask 130144
    %178 = vst.msk [vmem:[#allocation0] sm:$0x1] %vm177, %v176
    %s179 = scalar_lea.vmem %s0, 2
    %v180 = vld [vmem:[%s179] sm:$0x1]
    %181 = vrot.lane.b32.xlu0 %v180, 8
    %v182 = vpop.permute.xlu0 %181
    %vm183 = vcmask 97344
    %184 = vst.msk [vmem:[#allocation0] sm:$0x1] %vm183, %v182
    %s185 = scalar_lea.vmem %s0, 1
    %v186 = vld [vmem:[%s185] sm:$0x1]
    %187 = vrot.lane.b32.xlu0 %v186, 4
    %v188 = vpop.permute.xlu0 %187
    %vm189 = vcmask 64544
    %190 = vst.msk [vmem:[#allocation0] sm:$0x1] %vm189, %v188
    %s192 = sshllo.u32 0, 1
    %v194 = vld [vmem:[#allocation0] sm:%s192]
    %s195 = sshllo.u32 0, 1
    %196 = vst [vmem:[%s1] sm:%s195] %v194

// kernel: upde_forward.1
$region0: #{upde_forward.1}
  #allocation0 [shape = 'u32[]', space=smem, size = 0x4, offset = 0x4, fixed_abs, tag = 'smem constant byte address 0x4 - core index']
  #allocation1 [shape = 'u32[144,128]{1,0:T(1,128)}', space=vmem, size = 0x12000, scoped, tag = 'internal scratch']
  #allocation2 [shape = 'f32[34,128]{1,0:T(8,128)}', space=vmem, size = 0x5000, scoped, tag = 'scratch operand']
  #allocation3 [shape = 'f32[34,256]{1,0:T(8,128)}', space=vmem, size = 0xa000, scoped, tag = 'scratch operand']
  %s0 = inlined_call_operand.vmem [shape: f32[2,32,128], index: 0, kind: input, shape index: {}]
  %s1 = inlined_call_operand.vmem [shape: f32[2,32,128], index: 1, kind: input, shape index: {}]
  %s2 = inlined_call_operand.vmem [shape: f32[128,128], index: 2, kind: input, shape index: {}]
  %s3 = inlined_call_operand.vmem [shape: f32[1,128], index: 3, kind: input, shape index: {}]
  %s4 = inlined_call_operand.vmem [shape: f32[3,128,128], index: 4, kind: input, shape index: {}]
  %s5 = inlined_call_operand.vmem [shape: f32[1,128], index: 5, kind: input, shape index: {}]
  %s6 = inlined_call_operand.vmem [shape: f32[3,128,128], index: 6, kind: input, shape index: {}]
  %s7 = inlined_call_operand.vmem [shape: f32[1,128], index: 7, kind: input, shape index: {}]
  %s8 = inlined_call_operand.vmem [shape: f32[3,256,128], index: 8, kind: input, shape index: {}]
  %s9 = inlined_call_operand.vmem [shape: f32[1,128], index: 9, kind: input, shape index: {}]
  %s10 = inlined_call_operand.vmem [shape: f32[2,32,128], index: 10, kind: output, shape index: {}]
  %s11 = sld [smem:[#allocation0]]
  $region73: #{upde_forward.1} parent=0
    _
  %s13 = ssub.s32 1, %s11
  %s14 = scalar_select 0, %s13, %s11
  loop: start=0, step=1, limit=4
  $region2: #{upde_forward.1} parent=0 // loop_pre_header
    _
  $region3: #{upde_forward.1} parent=0 // loop_header
    %s16 = sphi 0, %s20
    %p17 = scmp.ge.s32.totalorder %s16, 4
    %s26 = sphi 0, %s28
    %s29 = sphi 0, %s26
    %s30 = sphi 0, %s29
    %s46 = sphi 0, %s30
    %s52 = sphi 0, %s54
    %s55 = sphi 0, %s52
    %s56 = sphi 0, %s55
    %s72 = sphi 0, %s56
    %s76 = sphi 0, %s76
    %s78 = sphi 0, %s76
    %s79 = sphi 0, %s78
    %s93 = sphi 0, %s79
    %s97 = sphi 0, %s97
    %s99 = sphi 0, %s97
    %s100 = sphi 0, %s99
    %s114 = sphi 0, %s100
    %s118 = sphi 0, %s118
    %s120 = sphi 0, %s118
    %s121 = sphi 0, %s120
    %s135 = sphi 0, %s121
    %s139 = sphi 0, %s139
    %s141 = sphi 0, %s139
    %s142 = sphi 0, %s141
    %s156 = sphi 0, %s142
    %s160 = sphi 0, %s160
    %s162 = sphi 0, %s160
    %s163 = sphi 0, %s162
    %s177 = sphi 0, %s163
    %s181 = sphi 0, %s181
    %s183 = sphi 0, %s181
    %s184 = sphi 0, %s183
    %s198 = sphi 0, %s184
    %s202 = sphi 0, %s202
    %s204 = sphi 0, %s202
    %s205 = sphi 0, %s204
    %s219 = sphi 0, %s205
    %s223 = sphi 0, %s223
    %s225 = sphi 0, %s223
    %s226 = sphi 0, %s225
    %s240 = sphi 0, %s226
    %s246 = sphi 0, %s248
    %s249 = sphi 0, %s246
    %s250 = sphi 0, %s249
    %s266 = sphi 0, %s250
  $region4: #{upde_forward.1} parent=0 // loop_header_branch
    %19 = sbr.rel (%p17) target = $region8
  $region5: #{upde_forward.1} parent=0 // loop_body
    %s21 = ssub.s32 %s16, 1
    %s22 = ssub.s32 %s16, 2
    %s23 = sadd.s32 %s16, 1
    %s24 = ssub.s32 %s16, %s23
    %p25 = scmp.eq.s32.totalorder %s24, 0
    %s27 = sadd.s32 %s26, 1
    %s28 = scalar_select %p25, %s26, %s27
    %p31 = pneg %p25
    %p32 = scmp.eq.s32.totalorder %s16, 1
    %p33 = por %p31, %p32
    %p34 = scmp.ne.s32.totalorder %s26, %s29
    %p35 = scmp.eq.s32.totalorder %s16, 0
    %p36 = por %p34, %p35
    %p37 = scmp.ne.s32.totalorder %s26, %s29
    %p38 = scmp.eq.s32.totalorder %s21, 1
    %p39 = por %p37, %p38
    %p40 = scmp.ne.s32.totalorder %s29, %s30
    %p41 = scmp.eq.s32.totalorder %s21, 0
    %p42 = por %p40, %p41
    %p43 = scmp.ne.s32.totalorder %s29, %s30
    %p44 = scmp.eq.s32.totalorder %s22, 1
    %p45 = por %p43, %p44
    %p47 = scmp.ne.s32.totalorder %s30, %s46
    %p48 = scmp.eq.s32.totalorder %s22, 0
    %p49 = por %p47, %p48
    %s50 = ssub.s32 %s16, %s23
    %p51 = scmp.eq.s32.totalorder %s50, 0
    %s53 = sadd.s32 %s52, 1
    %s54 = scalar_select %p51, %s52, %s53
    %p57 = pneg %p51
    %p58 = scmp.eq.s32.totalorder %s16, 1
    %p59 = por %p57, %p58
    %p60 = scmp.ne.s32.totalorder %s52, %s55
    %p61 = scmp.eq.s32.totalorder %s16, 0
    %p62 = por %p60, %p61
    %p63 = scmp.ne.s32.totalorder %s52, %s55
    %p64 = scmp.eq.s32.totalorder %s21, 1
    %p65 = por %p63, %p64
    %p66 = scmp.ne.s32.totalorder %s55, %s56
    %p67 = scmp.eq.s32.totalorder %s21, 0
    %p68 = por %p66, %p67
    %p69 = scmp.ne.s32.totalorder %s55, %s56
    %p70 = scmp.eq.s32.totalorder %s22, 1
    %p71 = por %p69, %p70
    %p73 = scmp.ne.s32.totalorder %s56, %s72
    %p74 = scmp.eq.s32.totalorder %s22, 0
    %p75 = por %p73, %p74
    %s77 = sadd.s32 %s76, 1
    %p80 = scmp.eq.s32.totalorder %s16, 1
    %p81 = scmp.ne.s32.totalorder %s76, %s78
    %p82 = scmp.eq.s32.totalorder %s16, 0
    %p83 = por %p81, %p82
    %p84 = scmp.ne.s32.totalorder %s76, %s78
    %p85 = scmp.eq.s32.totalorder %s21, 1
    %p86 = por %p84, %p85
    %p87 = scmp.ne.s32.totalorder %s78, %s79
    %p88 = scmp.eq.s32.totalorder %s21, 0
    %p89 = por %p87, %p88
    %p90 = scmp.ne.s32.totalorder %s78, %s79
    %p91 = scmp.eq.s32.totalorder %s22, 1
    %p92 = por %p90, %p91
    %p94 = scmp.ne.s32.totalorder %s79, %s93
    %p95 = scmp.eq.s32.totalorder %s22, 0
    %p96 = por %p94, %p95
    %s98 = sadd.s32 %s97, 1
    %p101 = scmp.eq.s32.totalorder %s16, 1
    %p102 = scmp.ne.s32.totalorder %s97, %s99
    %p103 = scmp.eq.s32.totalorder %s16, 0
    %p104 = por %p102, %p103
    %p105 = scmp.ne.s32.totalorder %s97, %s99
    %p106 = scmp.eq.s32.totalorder %s21, 1
    %p107 = por %p105, %p106
    %p108 = scmp.ne.s32.totalorder %s99, %s100
    %p109 = scmp.eq.s32.totalorder %s21, 0
    %p110 = por %p108, %p109
    %p111 = scmp.ne.s32.totalorder %s99, %s100
    %p112 = scmp.eq.s32.totalorder %s22, 1
    %p113 = por %p111, %p112
    %p115 = scmp.ne.s32.totalorder %s100, %s114
    %p116 = scmp.eq.s32.totalorder %s22, 0
    %p117 = por %p115, %p116
    %s119 = sadd.s32 %s118, 1
    %p122 = scmp.eq.s32.totalorder %s16, 1
    %p123 = scmp.ne.s32.totalorder %s118, %s120
    %p124 = scmp.eq.s32.totalorder %s16, 0
    %p125 = por %p123, %p124
    %p126 = scmp.ne.s32.totalorder %s118, %s120
    %p127 = scmp.eq.s32.totalorder %s21, 1
    %p128 = por %p126, %p127
    %p129 = scmp.ne.s32.totalorder %s120, %s121
    %p130 = scmp.eq.s32.totalorder %s21, 0
    %p131 = por %p129, %p130
    %p132 = scmp.ne.s32.totalorder %s120, %s121
    %p133 = scmp.eq.s32.totalorder %s22, 1
    %p134 = por %p132, %p133
    %p136 = scmp.ne.s32.totalorder %s121, %s135
    %p137 = scmp.eq.s32.totalorder %s22, 0
    %p138 = por %p136, %p137
    %s140 = sadd.s32 %s139, 1
    %p143 = scmp.eq.s32.totalorder %s16, 1
    %p144 = scmp.ne.s32.totalorder %s139, %s141
    %p145 = scmp.eq.s32.totalorder %s16, 0
    %p146 = por %p144, %p145
    %p147 = scmp.ne.s32.totalorder %s139, %s141
    %p148 = scmp.eq.s32.totalorder %s21, 1
    %p149 = por %p147, %p148
    %p150 = scmp.ne.s32.totalorder %s141, %s142
    %p151 = scmp.eq.s32.totalorder %s21, 0
    %p152 = por %p150, %p151
    %p153 = scmp.ne.s32.totalorder %s141, %s142
    %p154 = scmp.eq.s32.totalorder %s22, 1
    %p155 = por %p153, %p154
    %p157 = scmp.ne.s32.totalorder %s142, %s156
    %p158 = scmp.eq.s32.totalorder %s22, 0
    %p159 = por %p157, %p158
    %s161 = sadd.s32 %s160, 1
    %p164 = scmp.eq.s32.totalorder %s16, 1
    %p165 = scmp.ne.s32.totalorder %s160, %s162
    %p166 = scmp.eq.s32.totalorder %s16, 0
    %p167 = por %p165, %p166
    %p168 = scmp.ne.s32.totalorder %s160, %s162
    %p169 = scmp.eq.s32.totalorder %s21, 1
    %p170 = por %p168, %p169
    %p171 = scmp.ne.s32.totalorder %s162, %s163
    %p172 = scmp.eq.s32.totalorder %s21, 0
    %p173 = por %p171, %p172
    %p174 = scmp.ne.s32.totalorder %s162, %s163
    %p175 = scmp.eq.s32.totalorder %s22, 1
    %p176 = por %p174, %p175
    %p178 = scmp.ne.s32.totalorder %s163, %s177
    %p179 = scmp.eq.s32.totalorder %s22, 0
    %p180 = por %p178, %p179
    %s182 = sadd.s32 %s181, 1
    %p185 = scmp.eq.s32.totalorder %s16, 1
    %p186 = scmp.ne.s32.totalorder %s181, %s183
    %p187 = scmp.eq.s32.totalorder %s16, 0
    %p188 = por %p186, %p187
    %p189 = scmp.ne.s32.totalorder %s181, %s183
    %p190 = scmp.eq.s32.totalorder %s21, 1
    %p191 = por %p189, %p190
    %p192 = scmp.ne.s32.totalorder %s183, %s184
    %p193 = scmp.eq.s32.totalorder %s21, 0
    %p194 = por %p192, %p193
    %p195 = scmp.ne.s32.totalorder %s183, %s184
    %p196 = scmp.eq.s32.totalorder %s22, 1
    %p197 = por %p195, %p196
    %p199 = scmp.ne.s32.totalorder %s184, %s198
    %p200 = scmp.eq.s32.totalorder %s22, 0
    %p201 = por %p199, %p200
    %s203 = sadd.s32 %s202, 1
    %p206 = scmp.eq.s32.totalorder %s16, 1
    %p207 = scmp.ne.s32.totalorder %s202, %s204
    %p208 = scmp.eq.s32.totalorder %s16, 0
    %p209 = por %p207, %p208
    %p210 = scmp.ne.s32.totalorder %s202, %s204
    %p211 = scmp.eq.s32.totalorder %s21, 1
    %p212 = por %p210, %p211
    %p213 = scmp.ne.s32.totalorder %s204, %s205
    %p214 = scmp.eq.s32.totalorder %s21, 0
    %p215 = por %p213, %p214
    %p216 = scmp.ne.s32.totalorder %s204, %s205
    %p217 = scmp.eq.s32.totalorder %s22, 1
    %p218 = por %p216, %p217
    %p220 = scmp.ne.s32.totalorder %s205, %s219
    %p221 = scmp.eq.s32.totalorder %s22, 0
    %p222 = por %p220, %p221
    %s224 = sadd.s32 %s223, 1
    %p227 = scmp.eq.s32.totalorder %s16, 1
    %p228 = scmp.ne.s32.totalorder %s223, %s225
    %p229 = scmp.eq.s32.totalorder %s16, 0
    %p230 = por %p228, %p229
    %p231 = scmp.ne.s32.totalorder %s223, %s225
    %p232 = scmp.eq.s32.totalorder %s21, 1
    %p233 = por %p231, %p232
    %p234 = scmp.ne.s32.totalorder %s225, %s226
    %p235 = scmp.eq.s32.totalorder %s21, 0
    %p236 = por %p234, %p235
    %p237 = scmp.ne.s32.totalorder %s225, %s226
    %p238 = scmp.eq.s32.totalorder %s22, 1
    %p239 = por %p237, %p238
    %p241 = scmp.ne.s32.totalorder %s226, %s240
    %p242 = scmp.eq.s32.totalorder %s22, 0
    %p243 = por %p241, %p242
    %s244 = ssub.s32 %s16, %s23
    %p245 = scmp.eq.s32.totalorder %s244, 0
    %s247 = sadd.s32 %s246, 1
    %s248 = scalar_select %p245, %s246, %s247
    %p251 = pneg %p245
    %p252 = scmp.eq.s32.totalorder %s16, 1
    %p253 = por %p251, %p252
    %p254 = scmp.ne.s32.totalorder %s246, %s249
    %p255 = scmp.eq.s32.totalorder %s16, 0
    %p256 = por %p254, %p255
    %p257 = scmp.ne.s32.totalorder %s246, %s249
    %p258 = scmp.eq.s32.totalorder %s21, 1
    %p259 = por %p257, %p258
    %p260 = scmp.ne.s32.totalorder %s249, %s250
    %p261 = scmp.eq.s32.totalorder %s21, 0
    %p262 = por %p260, %p261
    %p263 = scmp.ne.s32.totalorder %s249, %s250
    %p264 = scmp.eq.s32.totalorder %s22, 1
    %p265 = por %p263, %p264
    %p267 = scmp.ne.s32.totalorder %s250, %s266
    %p268 = scmp.eq.s32.totalorder %s22, 0
    %p269 = por %p267, %p268
    %p270 = scmp.le.s32.totalorder 1, %s16
    %p271 = scmp.lt.s32.totalorder %s16, 3
    %p272 = pnand %p270, %p271
    %p273 = pneg %p272
    // Predicated region
    $region9: #{upde_forward.1} parent=5 // pred_check
      _
    $region10: #{upde_forward.1} parent=5 // pred_check_branch
      %275 = sbr.rel (%p272) target = $region12
    $region11: #{upde_forward.1} parent=5 // pred_region
      %s276 = ssub.s32 %s16, 1
      // Predicated region
      $region13: #{upde_forward.1} parent=11 // pred_check
        %p277 = pneg %p89
      $region14: #{upde_forward.1} parent=11 // pred_check_branch
        %279 = sbr.rel (%p277) target = $region16
      $region15: #{upde_forward.1} parent=11 // pred_region
        _
      $region16: #{upde_forward.1} parent=11 // pred_fallthru
        _
      // Predicated region
      $region17: #{upde_forward.1} parent=11 // pred_check
        %p280 = pneg %p110
      $region18: #{upde_forward.1} parent=11 // pred_check_branch
        %282 = sbr.rel (%p280) target = $region20
      $region19: #{upde_forward.1} parent=11 // pred_region
        _
      $region20: #{upde_forward.1} parent=11 // pred_fallthru
        _
      // Predicated region
      $region21: #{upde_forward.1} parent=11 // pred_check
        %p283 = pneg %p131
      $region22: #{upde_forward.1} parent=11 // pred_check_branch
        %285 = sbr.rel (%p283) target = $region24
      $region23: #{upde_forward.1} parent=11 // pred_region
        _
      $region24: #{upde_forward.1} parent=11 // pred_fallthru
        _
      // Predicated region
      $region25: #{upde_forward.1} parent=11 // pred_check
        %p286 = pneg %p152
      $region26: #{upde_forward.1} parent=11 // pred_check_branch
        %288 = sbr.rel (%p286) target = $region28
      $region27: #{upde_forward.1} parent=11 // pred_region
        _
      $region28: #{upde_forward.1} parent=11 // pred_fallthru
        _
      // Predicated region
      $region29: #{upde_forward.1} parent=11 // pred_check
        %p289 = pneg %p173
      $region30: #{upde_forward.1} parent=11 // pred_check_branch
        %291 = sbr.rel (%p289) target = $region32
      $region31: #{upde_forward.1} parent=11 // pred_region
        _
      $region32: #{upde_forward.1} parent=11 // pred_fallthru
        _
      // Predicated region
      $region33: #{upde_forward.1} parent=11 // pred_check
        %p292 = pneg %p194
      $region34: #{upde_forward.1} parent=11 // pred_check_branch
        %294 = sbr.rel (%p292) target = $region36
      $region35: #{upde_forward.1} parent=11 // pred_region
        _
      $region36: #{upde_forward.1} parent=11 // pred_fallthru
        _
      // Predicated region
      $region37: #{upde_forward.1} parent=11 // pred_check
        %p295 = pneg %p215
      $region38: #{upde_forward.1} parent=11 // pred_check_branch
        %297 = sbr.rel (%p295) target = $region40
      $region39: #{upde_forward.1} parent=11 // pred_region
        _
      $region40: #{upde_forward.1} parent=11 // pred_fallthru
        _
      // Predicated region
      $region41: #{upde_forward.1} parent=11 // pred_check
        %p298 = pneg %p236
      $region42: #{upde_forward.1} parent=11 // pred_check_branch
        %300 = sbr.rel (%p298) target = $region44
      $region43: #{upde_forward.1} parent=11 // pred_region
        _
      $region44: #{upde_forward.1} parent=11 // pred_fallthru
        _
    $region12: #{upde_forward.1} parent=5 // pred_fallthru
      _
    %p301 = scmp.lt.s32.totalorder %s16, 2
    // Predicated region
    $region45: #{upde_forward.1} parent=5 // pred_check
      %p302 = pneg %p301
    $region46: #{upde_forward.1} parent=5 // pred_check_branch
      %304 = sbr.rel (%p302) target = $region48
    $region47: #{upde_forward.1} parent=5 // pred_region
      // Predicated region
      $region49: #{upde_forward.1} parent=47 // pred_check
        %p305 = pneg %p36
      $region50: #{upde_forward.1} parent=47 // pred_check_branch
        %307 = sbr.rel (%p305) target = $region52
      $region51: #{upde_forward.1} parent=47 // pred_region
        %p308 = scmp.lt.s32.totalorder %s16, 1
        %s309 = scalar_select %p308, %s16, 1
        %s310 = smul.addr %s309, 4
        %s311 = smul.addr %s310, 8
        %s312 = scalar_lea.vmem %s0, %s311
      $region52: #{upde_forward.1} parent=47 // pred_fallthru
        _
      // Predicated region
      $region53: #{upde_forward.1} parent=47 // pred_check
        %p313 = pneg %p62
      $region54: #{upde_forward.1} parent=47 // pred_check_branch
        %315 = sbr.rel (%p313) target = $region56
      $region55: #{upde_forward.1} parent=47 // pred_region
        %p316 = scmp.lt.s32.totalorder %s16, 1
        %s317 = scalar_select %p316, %s16, 1
        %s318 = smul.addr %s317, 4
        %s319 = smul.addr %s318, 8
        %s320 = scalar_lea.vmem %s1, %s319
      $region56: #{upde_forward.1} parent=47 // pred_fallthru
        _
    $region48: #{upde_forward.1} parent=5 // pred_fallthru
      _
    %p321 = scmp.le.s32.totalorder 1, %s16
    %p322 = scmp.lt.s32.totalorder %s16, 3
    %p323 = pnand %p321, %p322
    %p324 = pneg %p323
    // Predicated region
    $region57: #{upde_forward.1} parent=5 // pred_check
      _
    $region58: #{upde_forward.1} parent=5 // pred_check_branch
      %326 = sbr.rel (%p323) target = $region60
    $region59: #{upde_forward.1} parent=5 // pred_region
      %s327 = ssub.s32 %s16, 1
      %p328 = scmp.lt.s32.totalorder %s21, 1
      %s329 = scalar_select %p328, %s21, 1
      %s330 = smul.addr %s329, 4
      %s331 = smul.addr %s330, 8
      %s332 = scalar_lea.vmem %s0, %s331
      %p333 = pneg %p42
      %p334 = pneg %p39
      %p335 = scmp.lt.s32.totalorder %s21, 1
      %s336 = scalar_select %p335, %s21, 1
      %s337 = smul.addr %s336, 4
      %s338 = smul.addr %s337, 8
      %s339 = scalar_lea.vmem %s1, %s338
      %p340 = pneg %p68
      %p341 = pneg %p65
      %p342 = pneg %p89
      %p343 = pneg %p86
      %p344 = pneg %p110
      %p345 = pneg %p107
      %p346 = pneg %p131
      %p347 = pneg %p128
      %p348 = pneg %p152
      %p349 = pneg %p149
      %p350 = pneg %p173
      %p351 = pneg %p170
      %p352 = pneg %p194
      %p353 = pneg %p191
      %p354 = pneg %p215
      %p355 = pneg %p212
      %p356 = pneg %p236
      %p357 = pneg %p233
      %p358 = pneg %p262
      %p359 = pneg %p259
      %p360 = scmp.lt.s32.totalorder %s21, 1
      %s361 = scalar_select %p360, %s21, 1
      %s362 = smul.addr %s361, 4
      %s363 = smul.addr %s362, 8
      %s364 = scalar_lea.vmem %s10, %s363
      %p365 = scmp.lt.s32.totalorder %s21, 1
      %s366 = scalar_select %p365, %s21, 1
      %s367 = smul.addr %s366, 4
      %s368 = smul.addr %s367, 8
      %s369 = scalar_lea.vmem %s0, %s368
      %p370 = scmp.lt.s32.totalorder %s21, 1
      %s371 = scalar_select %p370, %s21, 1
      %s372 = smul.addr %s371, 4
      %s373 = smul.addr %s372, 8
      %s374 = scalar_lea.vmem %s1, %s373
      %p375 = scmp.lt.s32.totalorder %s21, 1
      %s376 = scalar_select %p375, %s21, 1
      %s377 = smul.addr %s376, 4
      %s378 = smul.addr %s377, 8
      %s379 = scalar_lea.vmem %s10, %s378
      %380 = vst [vmem:[#allocation2] sm:$0x1] 0.0
      %381 = vst [vmem:[#allocation2 + $0x21] sm:$0x1] 0.0
      %v382 = vlaneseq
      %vm383 = vcmp.ge.s32.totalorder %v382, 0
      %vm384 = vcmp.lt.s32.totalorder %v382, 256
      %vm385 = vmand %vm383, %vm384
      %386 = vst.msk [vmem:[#allocation3] ss:$8 sm:$0x3] %vm385, 0.0
      %387 = vst.msk [vmem:[#allocation3] ss:$8 sm:$0x0] %vm385, 0.0
      %s388 = scalar_lea.vmem [#allocation3], 65
      %389 = vst.msk [vmem:[%s388] ss:$8 sm:$0x3] %vm385, 0.0
      %390 = vst.msk [vmem:[%s388] ss:$8 sm:$0x0] %vm385, 0.0
      %v391 = vld [vmem:[%s369] sm:$0xff]
      %v392 = vld [vmem:[%s369 + $0x8] sm:$0xff]
      %v393 = vld [vmem:[%s369 + $0x10] sm:$0xff]
      %v394 = vld [vmem:[%s369 + $0x18] sm:$0xff]
      %v395 = vld [vmem:[%s2] sm:$0xff]
      %v396 = vld [vmem:[%s2 + $0x8] sm:$0xff]
      %v397 = vld [vmem:[%s2 + $0x10] sm:$0xff]
      %v398 = vld [vmem:[%s2 + $0x18] sm:$0xff]
      %v399 = vld [vmem:[%s2 + $0x20] sm:$0xff]
      %v400 = vld [vmem:[%s2 + $0x28] sm:$0xff]
      %v401 = vld [vmem:[%s2 + $0x30] sm:$0xff]
      %v402 = vld [vmem:[%s2 + $0x38] sm:$0xff]
      %v403 = vld [vmem:[%s2 + $0x40] sm:$0xff]
      %v404 = vld [vmem:[%s2 + $0x48] sm:$0xff]
      %v405 = vld [vmem:[%s2 + $0x50] sm:$0xff]
      %v406 = vld [vmem:[%s2 + $0x58] sm:$0xff]
      %v407 = vld [vmem:[%s2 + $0x60] sm:$0xff]
      %v408 = vld [vmem:[%s2 + $0x68] sm:$0xff]
      %v409 = vld [vmem:[%s2 + $0x70] sm:$0xff]
      %v410 = vld [vmem:[%s2 + $0x78] sm:$0xff]
      %v411 = vld [vmem:[%s3] sm:$0x1]
      %v413 = vlaneseq
      %v414 = vshrl.u32 %v413, 7
      %v415 = vsub.s32 0, %v414
      %v416 = vrot.slane %v411, %v415
      %418 = vmatprep.subr.mxu0 0.0
      %419 = vmatpush1.msra.mxu0 %v395
      %420 = vmatprep.subr.mxu0 0.0
      %421 = vmatpush1.msra.mxu0 %v396
      %422 = vmatprep.subr.mxu0 0.0
      %423 = vmatpush1.msra.mxu0 %v397
      %424 = vmatprep.subr.mxu0 0.0
      %425 = vmatpush1.msra.mxu0 %v398
      %426 = vmatprep.subr.mxu0 0.0
      %427 = vmatpush1.msra.mxu0 %v399
      %428 = vmatprep.subr.mxu0 0.0
      %429 = vmatpush1.msra.mxu0 %v400
      %430 = vmatprep.subr.mxu0 0.0
      %431 = vmatpush1.msra.mxu0 %v401
      %432 = vmatprep.subr.mxu0 0.0
      %433 = vmatpush1.msra.mxu0 %v402
      %434 = vmatprep.subr.mxu0 0.0
      %435 = vmatpush1.msra.mxu0 %v403
      %436 = vmatprep.subr.mxu0 0.0
      %437 = vmatpush1.msra.mxu0 %v404
      %438 = vmatprep.subr.mxu0 0.0
      %439 = vmatpush1.msra.mxu0 %v405
      %440 = vmatprep.subr.mxu0 0.0
      %441 = vmatpush1.msra.mxu0 %v406
      %442 = vmatprep.subr.mxu0 0.0
      %443 = vmatpush1.msra.mxu0 %v407
      %444 = vmatprep.subr.mxu0 0.0
      %445 = vmatpush1.msra.mxu0 %v408
      %446 = vmatprep.subr.mxu0 0.0
      %447 = vmatpush1.msra.mxu0 %v409
      %448 = vmatprep.subr.mxu0 0.0
      %449 = vmatpush1.msra.mxu0 %v410
      %450 = vmatprep.subr.mxu0 0.0
      %451 = vmatpush1.msra.mxu0 0.0
      %452 = vmatprep.subr.mxu0 0.0
      %453 = vmatpush1.msra.mxu0 0.0
      %454 = vmatprep.subr.mxu0 0.0
      %455 = vmatpush1.msra.mxu0 0.0
      %456 = vmatprep.subr.mxu0 0.0
      %457 = vmatpush1.msra.mxu0 0.0
      %458 = vmatprep.subr.mxu0 0.0
      %459 = vmatpush1.msra.mxu0 0.0
      %460 = vmatprep.subr.mxu0 0.0
      %461 = vmatpush1.msra.mxu0 0.0
      %462 = vmatprep.subr.mxu0 0.0
      %463 = vmatpush1.msra.mxu0 0.0
      %464 = vmatprep.subr.mxu0 0.0
      %465 = vmatpush1.msra.mxu0 0.0
      %466 = vmatprep.subr.mxu0 0.0
      %467 = vmatpush1.msra.mxu0 0.0
      %468 = vmatprep.subr.mxu0 0.0
      %469 = vmatpush1.msra.mxu0 0.0
      %470 = vmatprep.subr.mxu0 0.0
      %471 = vmatpush1.msra.mxu0 0.0
      %472 = vmatprep.subr.mxu0 0.0
      %473 = vmatpush1.msra.mxu0 0.0
      %474 = vmatprep.subr.mxu0 0.0
      %475 = vmatpush1.msra.mxu0 0.0
      %476 = vmatprep.subr.mxu0 0.0
      %477 = vmatpush1.msra.mxu0 0.0
      %478 = vmatprep.subr.mxu0 0.0
      %479 = vmatpush1.msra.mxu0 0.0
      %480 = vmatprep.subr.mxu0 0.0
      %481 = vmatpush1.msra.mxu0 0.0
      %482 = vmatprep.mubr.f32.mxu0 0.0
      %483 = vmatmul.mubr.f32.gmra.mrb[0].mxu0 %v391
      %v484 = vpop.f32.mrb[0].mxu0
      %v485 = vadd.f32 %v416, %v484
      %v486 = vpop.f32.mrb[0].mxu0
      %487 = vmatprep.mubr.f32.mxu0 0.0
      %488 = vmatmul.mubr.f32.gmra.mrb[0].mxu0 %v392
      %v489 = vpop.f32.mrb[0].mxu0
      %v490 = vadd.f32 %v416, %v489
      %v491 = vpop.f32.mrb[0].mxu0
      %492 = vmatprep.mubr.f32.mxu0 0.0
      %493 = vmatmul.mubr.f32.gmra.mrb[0].mxu0 %v393
      %v494 = vpop.f32.mrb[0].mxu0
      %v495 = vadd.f32 %v416, %v494
      %v496 = vpop.f32.mrb[0].mxu0
      %497 = vmatprep.mubr.f32.mxu0 0.0
      %498 = vmatmul.mubr.f32.gmra.mrb[0].mxu0 %v394
      %v499 = vpop.f32.mrb[0].mxu0
      %v500 = vadd.f32 %v416, %v499
      %v501 = vpop.f32.mrb[0].mxu0
      %502 = vdwg.mxu0
      %503 = vst [vmem:[#allocation2 + $0x1] sm:$0xff] %v485
      %504 = vst [vmem:[#allocation2 + $0x9] sm:$0xff] %v490
      %505 = vst [vmem:[#allocation2 + $0x11] sm:$0xff] %v495
      %506 = vst [vmem:[#allocation2 + $0x19] sm:$0xff] %v500
      %v507 = vld [vmem:[#allocation2] sm:$0xff]
      %v508 = vld [vmem:[#allocation2 + $0x8] sm:$0xff]
      %v509 = vld [vmem:[#allocation2 + $0x10] sm:$0xff]
      %v510 = vld [vmem:[#allocation2 + $0x18] sm:$0xff]
      %v511 = vld [vmem:[%s4] sm:$0xff]
      %v512 = vld [vmem:[%s4 + $0x8] sm:$0xff]
      %v513 = vld [vmem:[%s4 + $0x10] sm:$0xff]
      %v514 = vld [vmem:[%s4 + $0x18] sm:$0xff]
      %v515 = vld [vmem:[%s4 + $0x20] sm:$0xff]
      %v516 = vld [vmem:[%s4 + $0x28] sm:$0xff]
      %v517 = vld [vmem:[%s4 + $0x30] sm:$0xff]
      %v518 = vld [vmem:[%s4 + $0x38] sm:$0xff]
      %v519 = vld [vmem:[%s4 + $0x40] sm:$0xff]
      %v520 = vld [vmem:[%s4 + $0x48] sm:$0xff]
      %v521 = vld [vmem:[%s4 + $0x50] sm:$0xff]
      %v522 = vld [vmem:[%s4 + $0x58] sm:$0xff]
      %v523 = vld [vmem:[%s4 + $0x60] sm:$0xff]
      %v524 = vld [vmem:[%s4 + $0x68] sm:$0xff]
      %v525 = vld [vmem:[%s4 + $0x70] sm:$0xff]
      %v526 = vld [vmem:[%s4 + $0x78] sm:$0xff]
      %v527 = vld [vmem:[%s5] sm:$0x1]
      %v529 = vlaneseq
      %v530 = vshrl.u32 %v529, 7
      %v531 = vsub.s32 0, %v530
      %v532 = vrot.slane %v527, %v531
      %534 = vmatprep.subr.mxu0 0.0
      %535 = vmatpush1.msra.mxu0 %v511
      %536 = vmatprep.subr.mxu0 0.0
      %537 = vmatpush1.msra.mxu0 %v512
      %538 = vmatprep.subr.mxu0 0.0
      %539 = vmatpush1.msra.mxu0 %v513
      %540 = vmatprep.subr.mxu0 0.0
      %541 = vmatpush1.msra.mxu0 %v514
      %542 = vmatprep.subr.mxu0 0.0
      %543 = vmatpush1.msra.mxu0 %v515
      %544 = vmatprep.subr.mxu0 0.0
      %545 = vmatpush1.msra.mxu0 %v516
      %546 = vmatprep.subr.mxu0 0.0
      %547 = vmatpush1.msra.mxu0 %v517
      %548 = vmatprep.subr.mxu0 0.0
      %549 = vmatpush1.msra.mxu0 %v518
      %550 = vmatprep.subr.mxu0 0.0
      %551 = vmatpush1.msra.mxu0 %v519
      %552 = vmatprep.subr.mxu0 0.0
      %553 = vmatpush1.msra.mxu0 %v520
      %554 = vmatprep.subr.mxu0 0.0
      %555 = vmatpush1.msra.mxu0 %v521
      %556 = vmatprep.subr.mxu0 0.0
      %557 = vmatpush1.msra.mxu0 %v522
      %558 = vmatprep.subr.mxu0 0.0
      %559 = vmatpush1.msra.mxu0 %v523
      %560 = vmatprep.subr.mxu0 0.0
      %561 = vmatpush1.msra.mxu0 %v524
      %562 = vmatprep.subr.mxu0 0.0
      %563 = vmatpush1.msra.mxu0 %v525
      %564 = vmatprep.subr.mxu0 0.0
      %565 = vmatpush1.msra.mxu0 %v526
      %566 = vmatprep.subr.mxu0 0.0
      %567 = vmatpush1.msra.mxu0 0.0
      %568 = vmatprep.subr.mxu0 0.0
      %569 = vmatpush1.msra.mxu0 0.0
      %570 = vmatprep.subr.mxu0 0.0
      %571 = vmatpush1.msra.mxu0 0.0
      %572 = vmatprep.subr.mxu0 0.0
      %573 = vmatpush1.msra.mxu0 0.0
      %574 = vmatprep.subr.mxu0 0.0
      %575 = vmatpush1.msra.mxu0 0.0
      %576 = vmatprep.subr.mxu0 0.0
      %577 = vmatpush1.msra.mxu0 0.0
      %578 = vmatprep.subr.mxu0 0.0
      %579 = vmatpush1.msra.mxu0 0.0
      %580 = vmatprep.subr.mxu0 0.0
      %581 = vmatpush1.msra.mxu0 0.0
      %582 = vmatprep.subr.mxu0 0.0
      %583 = vmatpush1.msra.mxu0 0.0
      %584 = vmatprep.subr.mxu0 0.0
      %585 = vmatpush1.msra.mxu0 0.0
      %586 = vmatprep.subr.mxu0 0.0
      %587 = vmatpush1.msra.mxu0 0.0
      %588 = vmatprep.subr.mxu0 0.0
      %589 = vmatpush1.msra.mxu0 0.0
      %590 = vmatprep.subr.mxu0 0.0
      %591 = vmatpush1.msra.mxu0 0.0
      %592 = vmatprep.subr.mxu0 0.0
      %593 = vmatpush1.msra.mxu0 0.0
      %594 = vmatprep.subr.mxu0 0.0
      %595 = vmatpush1.msra.mxu0 0.0
      %596 = vmatprep.subr.mxu0 0.0
      %597 = vmatpush1.msra.mxu0 0.0
      %598 = vmatprep.mubr.f32.mxu0 0.0
      %599 = vmatmul.mubr.f32.gmra.mrb[0].mxu0 %v507
      %v600 = vpop.f32.mrb[0].mxu0
      %v601 = vadd.f32 %v532, %v600
      %v602 = vpop.f32.mrb[0].mxu0
      %603 = vmatprep.mubr.f32.mxu0 0.0
      %604 = vmatmul.mubr.f32.gmra.mrb[0].mxu0 %v508
      %v605 = vpop.f32.mrb[0].mxu0
      %v606 = vadd.f32 %v532, %v605
      %v607 = vpop.f32.mrb[0].mxu0
      %608 = vmatprep.mubr.f32.mxu0 0.0
      %609 = vmatmul.mubr.f32.gmra.mrb[0].mxu0 %v509
      %v610 = vpop.f32.mrb[0].mxu0
      %v611 = vadd.f32 %v532, %v610
      %v612 = vpop.f32.mrb[0].mxu0
      %613 = vmatprep.mubr.f32.mxu0 0.0
      %614 = vmatmul.mubr.f32.gmra.mrb[0].mxu0 %v510
      %v615 = vpop.f32.mrb[0].mxu0
      %v616 = vadd.f32 %v532, %v615
      %v617 = vpop.f32.mrb[0].mxu0
      %618 = vdwg.mxu0
      %v619 = vld [vmem:[#allocation2 + $0x1] sm:$0xff]
      %v620 = vld [vmem:[#allocation2 + $0x9] sm:$0xff]
      %v621 = vld [vmem:[#allocation2 + $0x11] sm:$0xff]
      %v622 = vld [vmem:[#allocation2 + $0x19] sm:$0xff]
      %s623 = scalar_lea.vmem %s4, 128
      %v624 = vld [vmem:[%s623] sm:$0xff]
      %v625 = vld [vmem:[%s623 + $0x8] sm:$0xff]
      %v626 = vld [vmem:[%s623 + $0x10] sm:$0xff]
      %v627 = vld [vmem:[%s623 + $0x18] sm:$0xff]
      %v628 = vld [vmem:[%s623 + $0x20] sm:$0xff]
      %v629 = vld [vmem:[%s623 + $0x28] sm:$0xff]
      %v630 = vld [vmem:[%s623 + $0x30] sm:$0xff]
      %v631 = vld [vmem:[%s623 + $0x38] sm:$0xff]
      %v632 = vld [vmem:[%s623 + $0x40] sm:$0xff]
      %v633 = vld [vmem:[%s623 + $0x48] sm:$0xff]
      %v634 = vld [vmem:[%s623 + $0x50] sm:$0xff]
      %v635 = vld [vmem:[%s623 + $0x58] sm:$0xff]
      %v636 = vld [vmem:[%s623 + $0x60] sm:$0xff]
      %v637 = vld [vmem:[%s623 + $0x68] sm:$0xff]
      %v638 = vld [vmem:[%s623 + $0x70] sm:$0xff]
      %v639 = vld [vmem:[%s623 + $0x78] sm:$0xff]
      %640 = vmatprep.subr.mxu0 0.0
      %641 = vmatpush1.msra.mxu0 %v624
      %642 = vmatprep.subr.mxu0 0.0
      %643 = vmatpush1.msra.mxu0 %v625
      %644 = vmatprep.subr.mxu0 0.0
      %645 = vmatpush1.msra.mxu0 %v626
      %646 = vmatprep.subr.mxu0 0.0
      %647 = vmatpush1.msra.mxu0 %v627
      %648 = vmatprep.subr.mxu0 0.0
      %649 = vmatpush1.msra.mxu0 %v628
      %650 = vmatprep.subr.mxu0 0.0
      %651 = vmatpush1.msra.mxu0 %v629
      %652 = vmatprep.subr.mxu0 0.0
      %653 = vmatpush1.msra.mxu0 %v630
      %654 = vmatprep.subr.mxu0 0.0
      %655 = vmatpush1.msra.mxu0 %v631
      %656 = vmatprep.subr.mxu0 0.0
      %657 = vmatpush1.msra.mxu0 %v632
      %658 = vmatprep.subr.mxu0 0.0
      %659 = vmatpush1.msra.mxu0 %v633
      %660 = vmatprep.subr.mxu0 0.0
      %661 = vmatpush1.msra.mxu0 %v634
      %662 = vmatprep.subr.mxu0 0.0
      %663 = vmatpush1.msra.mxu0 %v635
      %664 = vmatprep.subr.mxu0 0.0
      %665 = vmatpush1.msra.mxu0 %v636
      %666 = vmatprep.subr.mxu0 0.0
      %667 = vmatpush1.msra.mxu0 %v637
      %668 = vmatprep.subr.mxu0 0.0
      %669 = vmatpush1.msra.mxu0 %v638
      %670 = vmatprep.subr.mxu0 0.0
      %671 = vmatpush1.msra.mxu0 %v639
      %672 = vmatprep.subr.mxu0 0.0
      %673 = vmatpush1.msra.mxu0 0.0
      %674 = vmatprep.subr.mxu0 0.0
      %675 = vmatpush1.msra.mxu0 0.0
      %676 = vmatprep.subr.mxu0 0.0
      %677 = vmatpush1.msra.mxu0 0.0
      %678 = vmatprep.subr.mxu0 0.0
      %679 = vmatpush1.msra.mxu0 0.0
      %680 = vmatprep.subr.mxu0 0.0
      %681 = vmatpush1.msra.mxu0 0.0
      %682 = vmatprep.subr.mxu0 0.0
      %683 = vmatpush1.msra.mxu0 0.0
      %684 = vmatprep.subr.mxu0 0.0
      %685 = vmatpush1.msra.mxu0 0.0
      %686 = vmatprep.subr.mxu0 0.0
      %687 = vmatpush1.msra.mxu0 0.0
      %688 = vmatprep.subr.mxu0 0.0
      %689 = vmatpush1.msra.mxu0 0.0
      %690 = vmatprep.subr.mxu0 0.0
      %691 = vmatpush1.msra.mxu0 0.0
      %692 = vmatprep.subr.mxu0 0.0
      %693 = vmatpush1.msra.mxu0 0.0
      %694 = vmatprep.subr.mxu0 0.0
      %695 = vmatpush1.msra.mxu0 0.0
      %696 = vmatprep.subr.mxu0 0.0
      %697 = vmatpush1.msra.mxu0 0.0
      %698 = vmatprep.subr.mxu0 0.0
      %699 = vmatpush1.msra.mxu0 0.0
      %700 = vmatprep.subr.mxu0 0.0
      %701 = vmatpush1.msra.mxu0 0.0
      %702 = vmatprep.subr.mxu0 0.0
      %703 = vmatpush1.msra.mxu0 0.0
      %704 = vmatprep.mubr.f32.mxu0 0.0
      %705 = vmatmul.mubr.f32.gmra.mrb[0].mxu0 %v619
      %v706 = vpop.f32.mrb[0].mxu0
      %v707 = vadd.f32 0.0, %v706
      %v708 = vpop.f32.mrb[0].mxu0
      %709 = vmatprep.mubr.f32.mxu0 0.0
      %710 = vmatmul.mubr.f32.gmra.mrb[0].mxu0 %v620
      %v711 = vpop.f32.mrb[0].mxu0
      %v712 = vadd.f32 0.0, %v711
      %v713 = vpop.f32.mrb[0].mxu0
      %714 = vmatprep.mubr.f32.mxu0 0.0
      %715 = vmatmul.mubr.f32.gmra.mrb[0].mxu0 %v621
      %v716 = vpop.f32.mrb[0].mxu0
      %v717 = vadd.f32 0.0, %v716
      %v718 = vpop.f32.mrb[0].mxu0
      %719 = vmatprep.mubr.f32.mxu0 0.0
      %720 = vmatmul.mubr.f32.gmra.mrb[0].mxu0 %v622
      %v721 = vpop.f32.mrb[0].mxu0
      %v722 = vadd.f32 0.0, %v721
      %v723 = vpop.f32.mrb[0].mxu0
      %724 = vdwg.mxu0
      %v725 = vadd.f32 %v601, %v707
      %v726 = vadd.f32 %v606, %v712
      %v727 = vadd.f32 %v611, %v717
      %v728 = vadd.f32 %v616, %v722
      %v729 = vld [vmem:[#allocation2 + $0x2] sm:$0xff]
      %v730 = vld [vmem:[#allocation2 + $0xa] sm:$0xff]
      %v731 = vld [vmem:[#allocation2 + $0x12] sm:$0xff]
      %v732 = vld [vmem:[#allocation2 + $0x1a] sm:$0xff]
      %s733 = scalar_lea.vmem %s4, 256
      %v734 = vld [vmem:[%s733] sm:$0xff]
      %v735 = vld [vmem:[%s733 + $0x8] sm:$0xff]
      %v736 = vld [vmem:[%s733 + $0x10] sm:$0xff]
      %v737 = vld [vmem:[%s733 + $0x18] sm:$0xff]
      %v738 = vld [vmem:[%s733 + $0x20] sm:$0xff]
      %v739 = vld [vmem:[%s733 + $0x28] sm:$0xff]
      %v740 = vld [vmem:[%s733 + $0x30] sm:$0xff]
      %v741 = vld [vmem:[%s733 + $0x38] sm:$0xff]
      %v742 = vld [vmem:[%s733 + $0x40] sm:$0xff]
      %v743 = vld [vmem:[%s733 + $0x48] sm:$0xff]
      %v744 = vld [vmem:[%s733 + $0x50] sm:$0xff]
      %v745 = vld [vmem:[%s733 + $0x58] sm:$0xff]
      %v746 = vld [vmem:[%s733 + $0x60] sm:$0xff]
      %v747 = vld [vmem:[%s733 + $0x68] sm:$0xff]
      %v748 = vld [vmem:[%s733 + $0x70] sm:$0xff]
      %v749 = vld [vmem:[%s733 + $0x78] sm:$0xff]
      %750 = vmatprep.subr.mxu0 0.0
      %751 = vmatpush1.msra.mxu0 %v734
      %752 = vmatprep.subr.mxu0 0.0
      %753 = vmatpush1.msra.mxu0 %v735
      %754 = vmatprep.subr.mxu0 0.0
      %755 = vmatpush1.msra.mxu0 %v736
      %756 = vmatprep.subr.mxu0 0.0
      %757 = vmatpush1.msra.mxu0 %v737
      %758 = vmatprep.subr.mxu0 0.0
      %759 = vmatpush1.msra.mxu0 %v738
      %760 = vmatprep.subr.mxu0 0.0
      %761 = vmatpush1.msra.mxu0 %v739
      %762 = vmatprep.subr.mxu0 0.0
      %763 = vmatpush1.msra.mxu0 %v740
      %764 = vmatprep.subr.mxu0 0.0
      %765 = vmatpush1.msra.mxu0 %v741
      %766 = vmatprep.subr.mxu0 0.0
      %767 = vmatpush1.msra.mxu0 %v742
      %768 = vmatprep.subr.mxu0 0.0
      %769 = vmatpush1.msra.mxu0 %v743
      %770 = vmatprep.subr.mxu0 0.0
      %771 = vmatpush1.msra.mxu0 %v744
      %772 = vmatprep.subr.mxu0 0.0
      %773 = vmatpush1.msra.mxu0 %v745
      %774 = vmatprep.subr.mxu0 0.0
      %775 = vmatpush1.msra.mxu0 %v746
      %776 = vmatprep.subr.mxu0 0.0
      %777 = vmatpush1.msra.mxu0 %v747
      %778 = vmatprep.subr.mxu0 0.0
      %779 = vmatpush1.msra.mxu0 %v748
      %780 = vmatprep.subr.mxu0 0.0
      %781 = vmatpush1.msra.mxu0 %v749
      %782 = vmatprep.subr.mxu0 0.0
      %783 = vmatpush1.msra.mxu0 0.0
      %784 = vmatprep.subr.mxu0 0.0
      %785 = vmatpush1.msra.mxu0 0.0
      %786 = vmatprep.subr.mxu0 0.0
      %787 = vmatpush1.msra.mxu0 0.0
      %788 = vmatprep.subr.mxu0 0.0
      %789 = vmatpush1.msra.mxu0 0.0
      %790 = vmatprep.subr.mxu0 0.0
      %791 = vmatpush1.msra.mxu0 0.0
      %792 = vmatprep.subr.mxu0 0.0
      %793 = vmatpush1.msra.mxu0 0.0
      %794 = vmatprep.subr.mxu0 0.0
      %795 = vmatpush1.msra.mxu0 0.0
      %796 = vmatprep.subr.mxu0 0.0
      %797 = vmatpush1.msra.mxu0 0.0
      %798 = vmatprep.subr.mxu0 0.0
      %799 = vmatpush1.msra.mxu0 0.0
      %800 = vmatprep.subr.mxu0 0.0
      %801 = vmatpush1.msra.mxu0 0.0
      %802 = vmatprep.subr.mxu0 0.0
      %803 = vmatpush1.msra.mxu0 0.0
      %804 = vmatprep.subr.mxu0 0.0
      %805 = vmatpush1.msra.mxu0 0.0
      %806 = vmatprep.subr.mxu0 0.0
      %807 = vmatpush1.msra.mxu0 0.0
      %808 = vmatprep.subr.mxu0 0.0
      %809 = vmatpush1.msra.mxu0 0.0
      %810 = vmatprep.subr.mxu0 0.0
      %811 = vmatpush1.msra.mxu0 0.0
      %812 = vmatprep.subr.mxu0 0.0
      %813 = vmatpush1.msra.mxu0 0.0
      %814 = vmatprep.mubr.f32.mxu0 0.0
      %815 = vmatmul.mubr.f32.gmra.mrb[0].mxu0 %v729
      %v816 = vpop.f32.mrb[0].mxu0
      %v817 = vadd.f32 0.0, %v816
      %v818 = vpop.f32.mrb[0].mxu0
      %819 = vmatprep.mubr.f32.mxu0 0.0
      %820 = vmatmul.mubr.f32.gmra.mrb[0].mxu0 %v730
      %v821 = vpop.f32.mrb[0].mxu0
      %v822 = vadd.f32 0.0, %v821
      %v823 = vpop.f32.mrb[0].mxu0
      %824 = vmatprep.mubr.f32.mxu0 0.0
      %825 = vmatmul.mubr.f32.gmra.mrb[0].mxu0 %v731
      %v826 = vpop.f32.mrb[0].mxu0
      %v827 = vadd.f32 0.0, %v826
      %v828 = vpop.f32.mrb[0].mxu0
      %829 = vmatprep.mubr.f32.mxu0 0.0
      %830 = vmatmul.mubr.f32.gmra.mrb[0].mxu0 %v732
      %v831 = vpop.f32.mrb[0].mxu0
      %v832 = vadd.f32 0.0, %v831
      %v833 = vpop.f32.mrb[0].mxu0
      %834 = vdwg.mxu0
      %v835 = vadd.f32 %v725, %v817
      %v836 = vadd.f32 %v726, %v822
      %v837 = vadd.f32 %v727, %v827
      %v838 = vadd.f32 %v728, %v832
      %vm839 = vcmp.gt.f32.partialorder %v835, 0.0
      %vm840 = vcmp.gt.f32.partialorder %v836, 0.0
      %vm841 = vcmp.gt.f32.partialorder %v837, 0.0
      %vm842 = vcmp.gt.f32.partialorder %v838, 0.0
      %v843 = vmul.f32 %v835, 0.01
      %v844 = vmul.f32 %v836, 0.01
      %v845 = vmul.f32 %v837, 0.01
      %v846 = vmul.f32 %v838, 0.01
      %v847 = vsel %vm839, %v835, %v843
      %v848 = vsel %vm840, %v836, %v844
      %v849 = vsel %vm841, %v837, %v845
      %v850 = vsel %vm842, %v838, %v846
      %851 = vst [vmem:[#allocation2 + $0x1] sm:$0xff] %v847
      %852 = vst [vmem:[#allocation2 + $0x9] sm:$0xff] %v848
      %853 = vst [vmem:[#allocation2 + $0x11] sm:$0xff] %v849
      %854 = vst [vmem:[#allocation2 + $0x19] sm:$0xff] %v850
      %v855 = vld [vmem:[#allocation2] sm:$0xff]
      %v856 = vld [vmem:[#allocation2 + $0x8] sm:$0xff]
      %v857 = vld [vmem:[#allocation2 + $0x10] sm:$0xff]
      %v858 = vld [vmem:[#allocation2 + $0x18] sm:$0xff]
      %v859 = vld [vmem:[%s6] sm:$0xff]
      %v860 = vld [vmem:[%s6 + $0x8] sm:$0xff]
      %v861 = vld [vmem:[%s6 + $0x10] sm:$0xff]
      %v862 = vld [vmem:[%s6 + $0x18] sm:$0xff]
      %v863 = vld [vmem:[%s6 + $0x20] sm:$0xff]
      %v864 = vld [vmem:[%s6 + $0x28] sm:$0xff]
      %v865 = vld [vmem:[%s6 + $0x30] sm:$0xff]
      %v866 = vld [vmem:[%s6 + $0x38] sm:$0xff]
      %v867 = vld [vmem:[%s6 + $0x40] sm:$0xff]
      %v868 = vld [vmem:[%s6 + $0x48] sm:$0xff]
      %v869 = vld [vmem:[%s6 + $0x50] sm:$0xff]
      %v870 = vld [vmem:[%s6 + $0x58] sm:$0xff]
      %v871 = vld [vmem:[%s6 + $0x60] sm:$0xff]
      %v872 = vld [vmem:[%s6 + $0x68] sm:$0xff]
      %v873 = vld [vmem:[%s6 + $0x70] sm:$0xff]
      %v874 = vld [vmem:[%s6 + $0x78] sm:$0xff]
      %v875 = vld [vmem:[%s7] sm:$0x1]
      %v877 = vlaneseq
      %v878 = vshrl.u32 %v877, 7
      %v879 = vsub.s32 0, %v878
      %v880 = vrot.slane %v875, %v879
      %882 = vmatprep.subr.mxu0 0.0
      %883 = vmatpush1.msra.mxu0 %v859
      %884 = vmatprep.subr.mxu0 0.0
      %885 = vmatpush1.msra.mxu0 %v860
      %886 = vmatprep.subr.mxu0 0.0
      %887 = vmatpush1.msra.mxu0 %v861
      %888 = vmatprep.subr.mxu0 0.0
      %889 = vmatpush1.msra.mxu0 %v862
      %890 = vmatprep.subr.mxu0 0.0
      %891 = vmatpush1.msra.mxu0 %v863
      %892 = vmatprep.subr.mxu0 0.0
      %893 = vmatpush1.msra.mxu0 %v864
      %894 = vmatprep.subr.mxu0 0.0
      %895 = vmatpush1.msra.mxu0 %v865
      %896 = vmatprep.subr.mxu0 0.0
      %897 = vmatpush1.msra.mxu0 %v866
      %898 = vmatprep.subr.mxu0 0.0
      %899 = vmatpush1.msra.mxu0 %v867
      %900 = vmatprep.subr.mxu0 0.0
      %901 = vmatpush1.msra.mxu0 %v868
      %902 = vmatprep.subr.mxu0 0.0
      %903 = vmatpush1.msra.mxu0 %v869
      %904 = vmatprep.subr.mxu0 0.0
      %905 = vmatpush1.msra.mxu0 %v870
      %906 = vmatprep.subr.mxu0 0.0
      %907 = vmatpush1.msra.mxu0 %v871
      %908 = vmatprep.subr.mxu0 0.0
      %909 = vmatpush1.msra.mxu0 %v872
      %910 = vmatprep.subr.mxu0 0.0
      %911 = vmatpush1.msra.mxu0 %v873
      %912 = vmatprep.subr.mxu0 0.0
      %913 = vmatpush1.msra.mxu0 %v874
      %914 = vmatprep.subr.mxu0 0.0
      %915 = vmatpush1.msra.mxu0 0.0
      %916 = vmatprep.subr.mxu0 0.0
      %917 = vmatpush1.msra.mxu0 0.0
      %918 = vmatprep.subr.mxu0 0.0
      %919 = vmatpush1.msra.mxu0 0.0
      %920 = vmatprep.subr.mxu0 0.0
      %921 = vmatpush1.msra.mxu0 0.0
      %922 = vmatprep.subr.mxu0 0.0
      %923 = vmatpush1.msra.mxu0 0.0
      %924 = vmatprep.subr.mxu0 0.0
      %925 = vmatpush1.msra.mxu0 0.0
      %926 = vmatprep.subr.mxu0 0.0
      %927 = vmatpush1.msra.mxu0 0.0
      %928 = vmatprep.subr.mxu0 0.0
      %929 = vmatpush1.msra.mxu0 0.0
      %930 = vmatprep.subr.mxu0 0.0
      %931 = vmatpush1.msra.mxu0 0.0
      %932 = vmatprep.subr.mxu0 0.0
      %933 = vmatpush1.msra.mxu0 0.0
      %934 = vmatprep.subr.mxu0 0.0
      %935 = vmatpush1.msra.mxu0 0.0
      %936 = vmatprep.subr.mxu0 0.0
      %937 = vmatpush1.msra.mxu0 0.0
      %938 = vmatprep.subr.mxu0 0.0
      %939 = vmatpush1.msra.mxu0 0.0
      %940 = vmatprep.subr.mxu0 0.0
      %941 = vmatpush1.msra.mxu0 0.0
      %942 = vmatprep.subr.mxu0 0.0
      %943 = vmatpush1.msra.mxu0 0.0
      %944 = vmatprep.subr.mxu0 0.0
      %945 = vmatpush1.msra.mxu0 0.0
      %946 = vmatprep.mubr.f32.mxu0 0.0
      %947 = vmatmul.mubr.f32.gmra.mrb[0].mxu0 %v855
      %v948 = vpop.f32.mrb[0].mxu0
      %v949 = vadd.f32 %v880, %v948
      %v950 = vpop.f32.mrb[0].mxu0
      %951 = vmatprep.mubr.f32.mxu0 0.0
      %952 = vmatmul.mubr.f32.gmra.mrb[0].mxu0 %v856
      %v953 = vpop.f32.mrb[0].mxu0
      %v954 = vadd.f32 %v880, %v953
      %v955 = vpop.f32.mrb[0].mxu0
      %956 = vmatprep.mubr.f32.mxu0 0.0
      %957 = vmatmul.mubr.f32.gmra.mrb[0].mxu0 %v857
      %v958 = vpop.f32.mrb[0].mxu0
      %v959 = vadd.f32 %v880, %v958
      %v960 = vpop.f32.mrb[0].mxu0
      %961 = vmatprep.mubr.f32.mxu0 0.0
      %962 = vmatmul.mubr.f32.gmra.mrb[0].mxu0 %v858
      %v963 = vpop.f32.mrb[0].mxu0
      %v964 = vadd.f32 %v880, %v963
      %v965 = vpop.f32.mrb[0].mxu0
      %966 = vdwg.mxu0
      %v967 = vld [vmem:[#allocation2 + $0x1] sm:$0xff]
      %v968 = vld [vmem:[#allocation2 + $0x9] sm:$0xff]
      %v969 = vld [vmem:[#allocation2 + $0x11] sm:$0xff]
      %v970 = vld [vmem:[#allocation2 + $0x19] sm:$0xff]
      %s971 = scalar_lea.vmem %s6, 128
      %v972 = vld [vmem:[%s971] sm:$0xff]
      %v973 = vld [vmem:[%s971 + $0x8] sm:$0xff]
      %v974 = vld [vmem:[%s971 + $0x10] sm:$0xff]
      %v975 = vld [vmem:[%s971 + $0x18] sm:$0xff]
      %v976 = vld [vmem:[%s971 + $0x20] sm:$0xff]
      %v977 = vld [vmem:[%s971 + $0x28] sm:$0xff]
      %v978 = vld [vmem:[%s971 + $0x30] sm:$0xff]
      %v979 = vld [vmem:[%s971 + $0x38] sm:$0xff]
      %v980 = vld [vmem:[%s971 + $0x40] sm:$0xff]
      %v981 = vld [vmem:[%s971 + $0x48] sm:$0xff]
      %v982 = vld [vmem:[%s971 + $0x50] sm:$0xff]
      %v983 = vld [vmem:[%s971 + $0x58] sm:$0xff]
      %v984 = vld [vmem:[%s971 + $0x60] sm:$0xff]
      %v985 = vld [vmem:[%s971 + $0x68] sm:$0xff]
      %v986 = vld [vmem:[%s971 + $0x70] sm:$0xff]
      %v987 = vld [vmem:[%s971 + $0x78] sm:$0xff]
      %988 = vmatprep.subr.mxu0 0.0
      %989 = vmatpush1.msra.mxu0 %v972
      %990 = vmatprep.subr.mxu0 0.0
      %991 = vmatpush1.msra.mxu0 %v973
      %992 = vmatprep.subr.mxu0 0.0
      %993 = vmatpush1.msra.mxu0 %v974
      %994 = vmatprep.subr.mxu0 0.0
      %995 = vmatpush1.msra.mxu0 %v975
      %996 = vmatprep.subr.mxu0 0.0
      %997 = vmatpush1.msra.mxu0 %v976
      %998 = vmatprep.subr.mxu0 0.0
      %999 = vmatpush1.msra.mxu0 %v977
      %1000 = vmatprep.subr.mxu0 0.0
      %1001 = vmatpush1.msra.mxu0 %v978
      %1002 = vmatprep.subr.mxu0 0.0
      %1003 = vmatpush1.msra.mxu0 %v979
      %1004 = vmatprep.subr.mxu0 0.0
      %1005 = vmatpush1.msra.mxu0 %v980
      %1006 = vmatprep.subr.mxu0 0.0
      %1007 = vmatpush1.msra.mxu0 %v981
      %1008 = vmatprep.subr.mxu0 0.0
      %1009 = vmatpush1.msra.mxu0 %v982
      %1010 = vmatprep.subr.mxu0 0.0
      %1011 = vmatpush1.msra.mxu0 %v983
      %1012 = vmatprep.subr.mxu0 0.0
      %1013 = vmatpush1.msra.mxu0 %v984
      %1014 = vmatprep.subr.mxu0 0.0
      %1015 = vmatpush1.msra.mxu0 %v985
      %1016 = vmatprep.subr.mxu0 0.0
      %1017 = vmatpush1.msra.mxu0 %v986
      %1018 = vmatprep.subr.mxu0 0.0
      %1019 = vmatpush1.msra.mxu0 %v987
      %1020 = vmatprep.subr.mxu0 0.0
      %1021 = vmatpush1.msra.mxu0 0.0
      %1022 = vmatprep.subr.mxu0 0.0
      %1023 = vmatpush1.msra.mxu0 0.0
      %1024 = vmatprep.subr.mxu0 0.0
      %1025 = vmatpush1.msra.mxu0 0.0
      %1026 = vmatprep.subr.mxu0 0.0
      %1027 = vmatpush1.msra.mxu0 0.0
      %1028 = vmatprep.subr.mxu0 0.0
      %1029 = vmatpush1.msra.mxu0 0.0
      %1030 = vmatprep.subr.mxu0 0.0
      %1031 = vmatpush1.msra.mxu0 0.0
      %1032 = vmatprep.subr.mxu0 0.0
      %1033 = vmatpush1.msra.mxu0 0.0
      %1034 = vmatprep.subr.mxu0 0.0
      %1035 = vmatpush1.msra.mxu0 0.0
      %1036 = vmatprep.subr.mxu0 0.0
      %1037 = vmatpush1.msra.mxu0 0.0
      %1038 = vmatprep.subr.mxu0 0.0
      %1039 = vmatpush1.msra.mxu0 0.0
      %1040 = vmatprep.subr.mxu0 0.0
      %1041 = vmatpush1.msra.mxu0 0.0
      %1042 = vmatprep.subr.mxu0 0.0
      %1043 = vmatpush1.msra.mxu0 0.0
      %1044 = vmatprep.subr.mxu0 0.0
      %1045 = vmatpush1.msra.mxu0 0.0
      %1046 = vmatprep.subr.mxu0 0.0
      %1047 = vmatpush1.msra.mxu0 0.0
      %1048 = vmatprep.subr.mxu0 0.0
      %1049 = vmatpush1.msra.mxu0 0.0
      %1050 = vmatprep.subr.mxu0 0.0
      %1051 = vmatpush1.msra.mxu0 0.0
      %1052 = vmatprep.mubr.f32.mxu0 0.0
      %1053 = vmatmul.mubr.f32.gmra.mrb[0].mxu0 %v967
      %v1054 = vpop.f32.mrb[0].mxu0
      %v1055 = vadd.f32 0.0, %v1054
      %v1056 = vpop.f32.mrb[0].mxu0
      %1057 = vmatprep.mubr.f32.mxu0 0.0
      %1058 = vmatmul.mubr.f32.gmra.mrb[0].mxu0 %v968
      %v1059 = vpop.f32.mrb[0].mxu0
      %v1060 = vadd.f32 0.0, %v1059
      %v1061 = vpop.f32.mrb[0].mxu0
      %1062 = vmatprep.mubr.f32.mxu0 0.0
      %1063 = vmatmul.mubr.f32.gmra.mrb[0].mxu0 %v969
      %v1064 = vpop.f32.mrb[0].mxu0
      %v1065 = vadd.f32 0.0, %v1064
      %v1066 = vpop.f32.mrb[0].mxu0
      %1067 = vmatprep.mubr.f32.mxu0 0.0
      %1068 = vmatmul.mubr.f32.gmra.mrb[0].mxu0 %v970
      %v1069 = vpop.f32.mrb[0].mxu0
      %v1070 = vadd.f32 0.0, %v1069
      %v1071 = vpop.f32.mrb[0].mxu0
      %1072 = vdwg.mxu0
      %v1073 = vadd.f32 %v949, %v1055
      %v1074 = vadd.f32 %v954, %v1060
      %v1075 = vadd.f32 %v959, %v1065
      %v1076 = vadd.f32 %v964, %v1070
      %v1077 = vld [vmem:[#allocation2 + $0x2] sm:$0xff]
      %v1078 = vld [vmem:[#allocation2 + $0xa] sm:$0xff]
      %v1079 = vld [vmem:[#allocation2 + $0x12] sm:$0xff]
      %v1080 = vld [vmem:[#allocation2 + $0x1a] sm:$0xff]
      %s1081 = scalar_lea.vmem %s6, 256
      %v1082 = vld [vmem:[%s1081] sm:$0xff]
      %v1083 = vld [vmem:[%s1081 + $0x8] sm:$0xff]
      %v1084 = vld [vmem:[%s1081 + $0x10] sm:$0xff]
      %v1085 = vld [vmem:[%s1081 + $0x18] sm:$0xff]
      %v1086 = vld [vmem:[%s1081 + $0x20] sm:$0xff]
      %v1087 = vld [vmem:[%s1081 + $0x28] sm:$0xff]
      %v1088 = vld [vmem:[%s1081 + $0x30] sm:$0xff]
      %v1089 = vld [vmem:[%s1081 + $0x38] sm:$0xff]
      %v1090 = vld [vmem:[%s1081 + $0x40] sm:$0xff]
      %v1091 = vld [vmem:[%s1081 + $0x48] sm:$0xff]
      %v1092 = vld [vmem:[%s1081 + $0x50] sm:$0xff]
      %v1093 = vld [vmem:[%s1081 + $0x58] sm:$0xff]
      %v1094 = vld [vmem:[%s1081 + $0x60] sm:$0xff]
      %v1095 = vld [vmem:[%s1081 + $0x68] sm:$0xff]
      %v1096 = vld [vmem:[%s1081 + $0x70] sm:$0xff]
      %v1097 = vld [vmem:[%s1081 + $0x78] sm:$0xff]
      %1098 = vmatprep.subr.mxu0 0.0
      %1099 = vmatpush1.msra.mxu0 %v1082
      %1100 = vmatprep.subr.mxu0 0.0
      %1101 = vmatpush1.msra.mxu0 %v1083
      %1102 = vmatprep.subr.mxu0 0.0
      %1103 = vmatpush1.msra.mxu0 %v1084
      %1104 = vmatprep.subr.mxu0 0.0
      %1105 = vmatpush1.msra.mxu0 %v1085
      %1106 = vmatprep.subr.mxu0 0.0
      %1107 = vmatpush1.msra.mxu0 %v1086
      %1108 = vmatprep.subr.mxu0 0.0
      %1109 = vmatpush1.msra.mxu0 %v1087
      %1110 = vmatprep.subr.mxu0 0.0
      %1111 = vmatpush1.msra.mxu0 %v1088
      %1112 = vmatprep.subr.mxu0 0.0
      %1113 = vmatpush1.msra.mxu0 %v1089
      %1114 = vmatprep.subr.mxu0 0.0
      %1115 = vmatpush1.msra.mxu0 %v1090
      %1116 = vmatprep.subr.mxu0 0.0
      %1117 = vmatpush1.msra.mxu0 %v1091
      %1118 = vmatprep.subr.mxu0 0.0
      %1119 = vmatpush1.msra.mxu0 %v1092
      %1120 = vmatprep.subr.mxu0 0.0
      %1121 = vmatpush1.msra.mxu0 %v1093
      %1122 = vmatprep.subr.mxu0 0.0
      %1123 = vmatpush1.msra.mxu0 %v1094
      %1124 = vmatprep.subr.mxu0 0.0
      %1125 = vmatpush1.msra.mxu0 %v1095
      %1126 = vmatprep.subr.mxu0 0.0
      %1127 = vmatpush1.msra.mxu0 %v1096
      %1128 = vmatprep.subr.mxu0 0.0
      %1129 = vmatpush1.msra.mxu0 %v1097
      %1130 = vmatprep.subr.mxu0 0.0
      %1131 = vmatpush1.msra.mxu0 0.0
      %1132 = vmatprep.subr.mxu0 0.0
      %1133 = vmatpush1.msra.mxu0 0.0
      %1134 = vmatprep.subr.mxu0 0.0
      %1135 = vmatpush1.msra.mxu0 0.0
      %1136 = vmatprep.subr.mxu0 0.0
      %1137 = vmatpush1.msra.mxu0 0.0
      %1138 = vmatprep.subr.mxu0 0.0
      %1139 = vmatpush1.msra.mxu0 0.0
      %1140 = vmatprep.subr.mxu0 0.0
      %1141 = vmatpush1.msra.mxu0 0.0
      %1142 = vmatprep.subr.mxu0 0.0
      %1143 = vmatpush1.msra.mxu0 0.0
      %1144 = vmatprep.subr.mxu0 0.0
      %1145 = vmatpush1.msra.mxu0 0.0
      %1146 = vmatprep.subr.mxu0 0.0
      %1147 = vmatpush1.msra.mxu0 0.0
      %1148 = vmatprep.subr.mxu0 0.0
      %1149 = vmatpush1.msra.mxu0 0.0
      %1150 = vmatprep.subr.mxu0 0.0
      %1151 = vmatpush1.msra.mxu0 0.0
      %1152 = vmatprep.subr.mxu0 0.0
      %1153 = vmatpush1.msra.mxu0 0.0
      %1154 = vmatprep.subr.mxu0 0.0
      %1155 = vmatpush1.msra.mxu0 0.0
      %1156 = vmatprep.subr.mxu0 0.0
      %1157 = vmatpush1.msra.mxu0 0.0
      %1158 = vmatprep.subr.mxu0 0.0
      %1159 = vmatpush1.msra.mxu0 0.0
      %1160 = vmatprep.subr.mxu0 0.0
      %1161 = vmatpush1.msra.mxu0 0.0
      %1162 = vmatprep.mubr.f32.mxu0 0.0
      %1163 = vmatmul.mubr.f32.gmra.mrb[0].mxu0 %v1077
      %v1164 = vpop.f32.mrb[0].mxu0
      %v1165 = vadd.f32 0.0, %v1164
      %v1166 = vpop.f32.mrb[0].mxu0
      %1167 = vmatprep.mubr.f32.mxu0 0.0
      %1168 = vmatmul.mubr.f32.gmra.mrb[0].mxu0 %v1078
      %v1169 = vpop.f32.mrb[0].mxu0
      %v1170 = vadd.f32 0.0, %v1169
      %v1171 = vpop.f32.mrb[0].mxu0
      %1172 = vmatprep.mubr.f32.mxu0 0.0
      %1173 = vmatmul.mubr.f32.gmra.mrb[0].mxu0 %v1079
      %v1174 = vpop.f32.mrb[0].mxu0
      %v1175 = vadd.f32 0.0, %v1174
      %v1176 = vpop.f32.mrb[0].mxu0
      %1177 = vmatprep.mubr.f32.mxu0 0.0
      %1178 = vmatmul.mubr.f32.gmra.mrb[0].mxu0 %v1080
      %v1179 = vpop.f32.mrb[0].mxu0
      %v1180 = vadd.f32 0.0, %v1179
      %v1181 = vpop.f32.mrb[0].mxu0
      %1182 = vdwg.mxu0
      %v1183 = vadd.f32 %v1073, %v1165
      %v1184 = vadd.f32 %v1074, %v1170
      %v1185 = vadd.f32 %v1075, %v1175
      %v1186 = vadd.f32 %v1076, %v1180
      %vm1191 = vcmask 1040384
      %v1192 = vrot.slane %v1183, 7
      %v1193 = vrot.slane %v1184, 7
      %v1194 = vsel %vm1191, %v1192, %v1193
      %v1195 = vrot.slane %v1185, 7
      %v1196 = vsel %vm1191, %v1193, %v1195
      %v1197 = vrot.slane %v1186, 7
      %v1198 = vsel %vm1191, %v1195, %v1197
      %1204 = vst [vmem:[#allocation3] sm:$0xfe] %v1192
      %1205 = vst [vmem:[#allocation3 + $0x10] sm:$0xff] %v1194
      %1206 = vst [vmem:[#allocation3 + $0x20] sm:$0xff] %v1196
      %1207 = vst [vmem:[#allocation3 + $0x30] sm:$0xff] %v1198
      %1208 = vst [vmem:[#allocation3 + $0x40] sm:$0x1] %v1197
      %v1209 = vld [vmem:[%s374] sm:$0xff]
      %v1210 = vld [vmem:[%s374 + $0x8] sm:$0xff]
      %v1211 = vld [vmem:[%s374 + $0x10] sm:$0xff]
      %v1212 = vld [vmem:[%s374 + $0x18] sm:$0xff]
      %v1217 = vrot.slane %v1209, 7
      %v1218 = vrot.slane %v1210, 7
      %v1219 = vsel %vm1191, %v1217, %v1218
      %v1220 = vrot.slane %v1211, 7
      %v1221 = vsel %vm1191, %v1218, %v1220
      %v1222 = vrot.slane %v1212, 7
      %v1223 = vsel %vm1191, %v1220, %v1222
      %1229 = vst [vmem:[#allocation3 + $0x8] sm:$0xfe] %v1217
      %1230 = vst [vmem:[#allocation3 + $0x18] sm:$0xff] %v1219
      %1231 = vst [vmem:[#allocation3 + $0x28] sm:$0xff] %v1221
      %1232 = vst [vmem:[#allocation3 + $0x38] sm:$0xff] %v1223
      %1233 = vst [vmem:[#allocation3 + $0x48] sm:$0x1] %v1222
      %v1234 = vld [vmem:[#allocation3] sm:$0xff]
      %v1235 = vld [vmem:[#allocation3 + $0x8] sm:$0xff]
      %v1236 = vld [vmem:[#allocation3 + $0x10] sm:$0xff]
      %v1237 = vld [vmem:[#allocation3 + $0x18] sm:$0xff]
      %v1238 = vld [vmem:[#allocation3 + $0x20] sm:$0xff]
      %v1239 = vld [vmem:[#allocation3 + $0x28] sm:$0xff]
      %v1240 = vld [vmem:[#allocation3 + $0x30] sm:$0xff]
      %v1241 = vld [vmem:[#allocation3 + $0x38] sm:$0xff]
      %v1242 = vld [vmem:[%s8] sm:$0xff]
      %v1243 = vld [vmem:[%s8 + $0x8] sm:$0xff]
      %v1244 = vld [vmem:[%s8 + $0x10] sm:$0xff]
      %v1245 = vld [vmem:[%s8 + $0x18] sm:$0xff]
      %v1246 = vld [vmem:[%s8 + $0x20] sm:$0xff]
      %v1247 = vld [vmem:[%s8 + $0x28] sm:$0xff]
      %v1248 = vld [vmem:[%s8 + $0x30] sm:$0xff]
      %v1249 = vld [vmem:[%s8 + $0x38] sm:$0xff]
      %v1250 = vld [vmem:[%s8 + $0x40] sm:$0xff]
      %v1251 = vld [vmem:[%s8 + $0x48] sm:$0xff]
      %v1252 = vld [vmem:[%s8 + $0x50] sm:$0xff]
      %v1253 = vld [vmem:[%s8 + $0x58] sm:$0xff]
      %v1254 = vld [vmem:[%s8 + $0x60] sm:$0xff]
      %v1255 = vld [vmem:[%s8 + $0x68] sm:$0xff]
      %v1256 = vld [vmem:[%s8 + $0x70] sm:$0xff]
      %v1257 = vld [vmem:[%s8 + $0x78] sm:$0xff]
      %v1258 = vld [vmem:[%s8 + $0x80] sm:$0xff]
      %v1259 = vld [vmem:[%s8 + $0x88] sm:$0xff]
      %v1260 = vld [vmem:[%s8 + $0x90] sm:$0xff]
      %v1261 = vld [vmem:[%s8 + $0x98] sm:$0xff]
      %v1262 = vld [vmem:[%s8 + $0xa0] sm:$0xff]
      %v1263 = vld [vmem:[%s8 + $0xa8] sm:$0xff]
      %v1264 = vld [vmem:[%s8 + $0xb0] sm:$0xff]
      %v1265 = vld [vmem:[%s8 + $0xb8] sm:$0xff]
      %v1266 = vld [vmem:[%s8 + $0xc0] sm:$0xff]
      %v1267 = vld [vmem:[%s8 + $0xc8] sm:$0xff]
      %v1268 = vld [vmem:[%s8 + $0xd0] sm:$0xff]
      %v1269 = vld [vmem:[%s8 + $0xd8] sm:$0xff]
      %v1270 = vld [vmem:[%s8 + $0xe0] sm:$0xff]
      %v1271 = vld [vmem:[%s8 + $0xe8] sm:$0xff]
      %v1272 = vld [vmem:[%s8 + $0xf0] sm:$0xff]
      %v1273 = vld [vmem:[%s8 + $0xf8] sm:$0xff]
      %v1274 = vld [vmem:[%s9] sm:$0x1]
      %v1276 = vlaneseq
      %v1277 = vshrl.u32 %v1276, 7
      %v1278 = vsub.s32 0, %v1277
      %v1279 = vrot.slane %v1274, %v1278
      %1281 = vmatprep.subr.mxu0 0.0
      %1282 = vmatpush1.msra.mxu0 %v1242
      %1283 = vmatprep.subr.mxu0 0.0
      %1284 = vmatpush1.msra.mxu0 %v1243
      %1285 = vmatprep.subr.mxu0 0.0
      %1286 = vmatpush1.msra.mxu0 %v1244
      %1287 = vmatprep.subr.mxu0 0.0
      %1288 = vmatpush1.msra.mxu0 %v1245
      %1289 = vmatprep.subr.mxu0 0.0
      %1290 = vmatpush1.msra.mxu0 %v1246
      %1291 = vmatprep.subr.mxu0 0.0
      %1292 = vmatpush1.msra.mxu0 %v1247
      %1293 = vmatprep.subr.mxu0 0.0
      %1294 = vmatpush1.msra.mxu0 %v1248
      %1295 = vmatprep.subr.mxu0 0.0
      %1296 = vmatpush1.msra.mxu0 %v1249
      %1297 = vmatprep.subr.mxu0 0.0
      %1298 = vmatpush1.msra.mxu0 %v1250
      %1299 = vmatprep.subr.mxu0 0.0
      %1300 = vmatpush1.msra.mxu0 %v1251
      %1301 = vmatprep.subr.mxu0 0.0
      %1302 = vmatpush1.msra.mxu0 %v1252
      %1303 = vmatprep.subr.mxu0 0.0
      %1304 = vmatpush1.msra.mxu0 %v1253
      %1305 = vmatprep.subr.mxu0 0.0
      %1306 = vmatpush1.msra.mxu0 %v1254
      %1307 = vmatprep.subr.mxu0 0.0
      %1308 = vmatpush1.msra.mxu0 %v1255
      %1309 = vmatprep.subr.mxu0 0.0
      %1310 = vmatpush1.msra.mxu0 %v1256
      %1311 = vmatprep.subr.mxu0 0.0
      %1312 = vmatpush1.msra.mxu0 %v1257
      %1313 = vmatprep.subr.mxu0 0.0
      %1314 = vmatpush1.msra.mxu0 %v1258
      %1315 = vmatprep.subr.mxu0 0.0
      %1316 = vmatpush1.msra.mxu0 %v1259
      %1317 = vmatprep.subr.mxu0 0.0
      %1318 = vmatpush1.msra.mxu0 %v1260
      %1319 = vmatprep.subr.mxu0 0.0
      %1320 = vmatpush1.msra.mxu0 %v1261
      %1321 = vmatprep.subr.mxu0 0.0
      %1322 = vmatpush1.msra.mxu0 %v1262
      %1323 = vmatprep.subr.mxu0 0.0
      %1324 = vmatpush1.msra.mxu0 %v1263
      %1325 = vmatprep.subr.mxu0 0.0
      %1326 = vmatpush1.msra.mxu0 %v1264
      %1327 = vmatprep.subr.mxu0 0.0
      %1328 = vmatpush1.msra.mxu0 %v1265
      %1329 = vmatprep.subr.mxu0 0.0
      %1330 = vmatpush1.msra.mxu0 %v1266
      %1331 = vmatprep.subr.mxu0 0.0
      %1332 = vmatpush1.msra.mxu0 %v1267
      %1333 = vmatprep.subr.mxu0 0.0
      %1334 = vmatpush1.msra.mxu0 %v1268
      %1335 = vmatprep.subr.mxu0 0.0
      %1336 = vmatpush1.msra.mxu0 %v1269
      %1337 = vmatprep.subr.mxu0 0.0
      %1338 = vmatpush1.msra.mxu0 %v1270
      %1339 = vmatprep.subr.mxu0 0.0
      %1340 = vmatpush1.msra.mxu0 %v1271
      %1341 = vmatprep.subr.mxu0 0.0
      %1342 = vmatpush1.msra.mxu0 %v1272
      %1343 = vmatprep.subr.mxu0 0.0
      %1344 = vmatpush1.msra.mxu0 %v1273
      %1345 = vmatprep.mubr.f32.mxu0 %v1235
      %1346 = vmatmul.mubr.f32.gmra.mrb[0].mxu0 %v1234
      %v1347 = vpop.f32.mrb[0].mxu0
      %v1348 = vadd.f32 %v1279, %v1347
      %v1349 = vpop.f32.mrb[0].mxu0
      %1350 = vmatprep.mubr.f32.mxu0 %v1237
      %1351 = vmatmul.mubr.f32.gmra.mrb[0].mxu0 %v1236
      %v1352 = vpop.f32.mrb[0].mxu0
      %v1353 = vadd.f32 %v1279, %v1352
      %v1354 = vpop.f32.mrb[0].mxu0
      %1355 = vmatprep.mubr.f32.mxu0 %v1239
      %1356 = vmatmul.mubr.f32.gmra.mrb[0].mxu0 %v1238
      %v1357 = vpop.f32.mrb[0].mxu0
      %v1358 = vadd.f32 %v1279, %v1357
      %v1359 = vpop.f32.mrb[0].mxu0
      %1360 = vmatprep.mubr.f32.mxu0 %v1241
      %1361 = vmatmul.mubr.f32.gmra.mrb[0].mxu0 %v1240
      %v1362 = vpop.f32.mrb[0].mxu0
      %v1363 = vadd.f32 %v1279, %v1362
      %v1364 = vpop.f32.mrb[0].mxu0
      %1365 = vdwg.mxu0
      %v1366 = vld [vmem:[#allocation3] sm:$0xfe]
      %v1367 = vld [vmem:[#allocation3 + $0x8] sm:$0xfe]
      %v1368 = vld [vmem:[#allocation3 + $0x10] sm:$0xff]
      %v1369 = vld [vmem:[#allocation3 + $0x18] sm:$0xff]
      %v1370 = vld [vmem:[#allocation3 + $0x20] sm:$0xff]
      %v1371 = vld [vmem:[#allocation3 + $0x28] sm:$0xff]
      %v1372 = vld [vmem:[#allocation3 + $0x30] sm:$0xff]
      %v1373 = vld [vmem:[#allocation3 + $0x38] sm:$0xff]
      %v1374 = vld [vmem:[#allocation3 + $0x40] sm:$0x1]
      %v1375 = vld [vmem:[#allocation3 + $0x48] sm:$0x1]
      %s1376 = scalar_lea.vmem %s8, 256
      %v1377 = vld [vmem:[%s1376] sm:$0xff]
      %v1378 = vld [vmem:[%s1376 + $0x8] sm:$0xff]
      %v1379 = vld [vmem:[%s1376 + $0x10] sm:$0xff]
      %v1380 = vld [vmem:[%s1376 + $0x18] sm:$0xff]
      %v1381 = vld [vmem:[%s1376 + $0x20] sm:$0xff]
      %v1382 = vld [vmem:[%s1376 + $0x28] sm:$0xff]
      %v1383 = vld [vmem:[%s1376 + $0x30] sm:$0xff]
      %v1384 = vld [vmem:[%s1376 + $0x38] sm:$0xff]
      %v1385 = vld [vmem:[%s1376 + $0x40] sm:$0xff]
      %v1386 = vld [vmem:[%s1376 + $0x48] sm:$0xff]
      %v1387 = vld [vmem:[%s1376 + $0x50] sm:$0xff]
      %v1388 = vld [vmem:[%s1376 + $0x58] sm:$0xff]
      %v1389 = vld [vmem:[%s1376 + $0x60] sm:$0xff]
      %v1390 = vld [vmem:[%s1376 + $0x68] sm:$0xff]
      %v1391 = vld [vmem:[%s1376 + $0x70] sm:$0xff]
      %v1392 = vld [vmem:[%s1376 + $0x78] sm:$0xff]
      %v1393 = vld [vmem:[%s1376 + $0x80] sm:$0xff]
      %v1394 = vld [vmem:[%s1376 + $0x88] sm:$0xff]
      %v1395 = vld [vmem:[%s1376 + $0x90] sm:$0xff]
      %v1396 = vld [vmem:[%s1376 + $0x98] sm:$0xff]
      %v1397 = vld [vmem:[%s1376 + $0xa0] sm:$0xff]
      %v1398 = vld [vmem:[%s1376 + $0xa8] sm:$0xff]
      %v1399 = vld [vmem:[%s1376 + $0xb0] sm:$0xff]
      %v1400 = vld [vmem:[%s1376 + $0xb8] sm:$0xff]
      %v1401 = vld [vmem:[%s1376 + $0xc0] sm:$0xff]
      %v1402 = vld [vmem:[%s1376 + $0xc8] sm:$0xff]
      %v1403 = vld [vmem:[%s1376 + $0xd0] sm:$0xff]
      %v1404 = vld [vmem:[%s1376 + $0xd8] sm:$0xff]
      %v1405 = vld [vmem:[%s1376 + $0xe0] sm:$0xff]
      %v1406 = vld [vmem:[%s1376 + $0xe8] sm:$0xff]
      %v1407 = vld [vmem:[%s1376 + $0xf0] sm:$0xff]
      %v1408 = vld [vmem:[%s1376 + $0xf8] sm:$0xff]
      %vm1419 = vcmask 1046528
      %v1420 = vrot.slane %v1366, 1
      %v1421 = vrot.slane %v1368, 1
      %v1422 = vsel %vm1419, %v1420, %v1421
      %v1423 = vrot.slane %v1367, 1
      %v1424 = vrot.slane %v1369, 1
      %v1425 = vsel %vm1419, %v1423, %v1424
      %v1426 = vrot.slane %v1370, 1
      %v1427 = vsel %vm1419, %v1421, %v1426
      %v1428 = vrot.slane %v1371, 1
      %v1429 = vsel %vm1419, %v1424, %v1428
      %v1430 = vrot.slane %v1372, 1
      %v1431 = vsel %vm1419, %v1426, %v1430
      %v1432 = vrot.slane %v1373, 1
      %v1433 = vsel %vm1419, %v1428, %v1432
      %v1434 = vrot.slane %v1374, 1
      %v1435 = vsel %vm1419, %v1430, %v1434
      %v1436 = vrot.slane %v1375, 1
      %v1437 = vsel %vm1419, %v1432, %v1436
      %1446 = vmatprep.subr.mxu0 0.0
      %1447 = vmatpush1.msra.mxu0 %v1377
      %1448 = vmatprep.subr.mxu0 0.0
      %1449 = vmatpush1.msra.mxu0 %v1378
      %1450 = vmatprep.subr.mxu0 0.0
      %1451 = vmatpush1.msra.mxu0 %v1379
      %1452 = vmatprep.subr.mxu0 0.0
      %1453 = vmatpush1.msra.mxu0 %v1380
      %1454 = vmatprep.subr.mxu0 0.0
      %1455 = vmatpush1.msra.mxu0 %v1381
      %1456 = vmatprep.subr.mxu0 0.0
      %1457 = vmatpush1.msra.mxu0 %v1382
      %1458 = vmatprep.subr.mxu0 0.0
      %1459 = vmatpush1.msra.mxu0 %v1383
      %1460 = vmatprep.subr.mxu0 0.0
      %1461 = vmatpush1.msra.mxu0 %v1384
      %1462 = vmatprep.subr.mxu0 0.0
      %1463 = vmatpush1.msra.mxu0 %v1385
      %1464 = vmatprep.subr.mxu0 0.0
      %1465 = vmatpush1.msra.mxu0 %v1386
      %1466 = vmatprep.subr.mxu0 0.0
      %1467 = vmatpush1.msra.mxu0 %v1387
      %1468 = vmatprep.subr.mxu0 0.0
      %1469 = vmatpush1.msra.mxu0 %v1388
      %1470 = vmatprep.subr.mxu0 0.0
      %1471 = vmatpush1.msra.mxu0 %v1389
      %1472 = vmatprep.subr.mxu0 0.0
      %1473 = vmatpush1.msra.mxu0 %v1390
      %1474 = vmatprep.subr.mxu0 0.0
      %1475 = vmatpush1.msra.mxu0 %v1391
      %1476 = vmatprep.subr.mxu0 0.0
      %1477 = vmatpush1.msra.mxu0 %v1392
      %1478 = vmatprep.subr.mxu0 0.0
      %1479 = vmatpush1.msra.mxu0 %v1393
      %1480 = vmatprep.subr.mxu0 0.0
      %1481 = vmatpush1.msra.mxu0 %v1394
      %1482 = vmatprep.subr.mxu0 0.0
      %1483 = vmatpush1.msra.mxu0 %v1395
      %1484 = vmatprep.subr.mxu0 0.0
      %1485 = vmatpush1.msra.mxu0 %v1396
      %1486 = vmatprep.subr.mxu0 0.0
      %1487 = vmatpush1.msra.mxu0 %v1397
      %1488 = vmatprep.subr.mxu0 0.0
      %1489 = vmatpush1.msra.mxu0 %v1398
      %1490 = vmatprep.subr.mxu0 0.0
      %1491 = vmatpush1.msra.mxu0 %v1399
      %1492 = vmatprep.subr.mxu0 0.0
      %1493 = vmatpush1.msra.mxu0 %v1400
      %1494 = vmatprep.subr.mxu0 0.0
      %1495 = vmatpush1.msra.mxu0 %v1401
      %1496 = vmatprep.subr.mxu0 0.0
      %1497 = vmatpush1.msra.mxu0 %v1402
      %1498 = vmatprep.subr.mxu0 0.0
      %1499 = vmatpush1.msra.mxu0 %v1403
      %1500 = vmatprep.subr.mxu0 0.0
      %1501 = vmatpush1.msra.mxu0 %v1404
      %1502 = vmatprep.subr.mxu0 0.0
      %1503 = vmatpush1.msra.mxu0 %v1405
      %1504 = vmatprep.subr.mxu0 0.0
      %1505 = vmatpush1.msra.mxu0 %v1406
      %1506 = vmatprep.subr.mxu0 0.0
      %1507 = vmatpush1.msra.mxu0 %v1407
      %1508 = vmatprep.subr.mxu0 0.0
      %1509 = vmatpush1.msra.mxu0 %v1408
      %1510 = vmatprep.mubr.f32.mxu0 %v1425
      %1511 = vmatmul.mubr.f32.gmra.mrb[0].mxu0 %v1422
      %v1512 = vpop.f32.mrb[0].mxu0
      %v1513 = vadd.f32 0.0, %v1512
      %v1514 = vpop.f32.mrb[0].mxu0
      %1515 = vmatprep.mubr.f32.mxu0 %v1429
      %1516 = vmatmul.mubr.f32.gmra.mrb[0].mxu0 %v1427
      %v1517 = vpop.f32.mrb[0].mxu0
      %v1518 = vadd.f32 0.0, %v1517
      %v1519 = vpop.f32.mrb[0].mxu0
      %1520 = vmatprep.mubr.f32.mxu0 %v1433
      %1521 = vmatmul.mubr.f32.gmra.mrb[0].mxu0 %v1431
      %v1522 = vpop.f32.mrb[0].mxu0
      %v1523 = vadd.f32 0.0, %v1522
      %v1524 = vpop.f32.mrb[0].mxu0
      %1525 = vmatprep.mubr.f32.mxu0 %v1437
      %1526 = vmatmul.mubr.f32.gmra.mrb[0].mxu0 %v1435
      %v1527 = vpop.f32.mrb[0].mxu0
      %v1528 = vadd.f32 0.0, %v1527
      %v1529 = vpop.f32.mrb[0].mxu0
      %1530 = vdwg.mxu0
      %v1531 = vadd.f32 %v1348, %v1513
      %v1532 = vadd.f32 %v1353, %v1518
      %v1533 = vadd.f32 %v1358, %v1523
      %v1534 = vadd.f32 %v1363, %v1528
      %v1535 = vld [vmem:[#allocation3] sm:$0xfc]
      %v1536 = vld [vmem:[#allocation3 + $0x8] sm:$0xfc]
      %v1537 = vld [vmem:[#allocation3 + $0x40] sm:$0x3]
      %v1538 = vld [vmem:[#allocation3 + $0x48] sm:$0x3]
      %s1539 = scalar_lea.vmem %s8, 512
      %v1540 = vld [vmem:[%s1539] sm:$0xff]
      %v1541 = vld [vmem:[%s1539 + $0x8] sm:$0xff]
      %v1542 = vld [vmem:[%s1539 + $0x10] sm:$0xff]
      %v1543 = vld [vmem:[%s1539 + $0x18] sm:$0xff]
      %v1544 = vld [vmem:[%s1539 + $0x20] sm:$0xff]
      %v1545 = vld [vmem:[%s1539 + $0x28] sm:$0xff]
      %v1546 = vld [vmem:[%s1539 + $0x30] sm:$0xff]
      %v1547 = vld [vmem:[%s1539 + $0x38] sm:$0xff]
      %v1548 = vld [vmem:[%s1539 + $0x40] sm:$0xff]
      %v1549 = vld [vmem:[%s1539 + $0x48] sm:$0xff]
      %v1550 = vld [vmem:[%s1539 + $0x50] sm:$0xff]
      %v1551 = vld [vmem:[%s1539 + $0x58] sm:$0xff]
      %v1552 = vld [vmem:[%s1539 + $0x60] sm:$0xff]
      %v1553 = vld [vmem:[%s1539 + $0x68] sm:$0xff]
      %v1554 = vld [vmem:[%s1539 + $0x70] sm:$0xff]
      %v1555 = vld [vmem:[%s1539 + $0x78] sm:$0xff]
      %v1556 = vld [vmem:[%s1539 + $0x80] sm:$0xff]
      %v1557 = vld [vmem:[%s1539 + $0x88] sm:$0xff]
      %v1558 = vld [vmem:[%s1539 + $0x90] sm:$0xff]
      %v1559 = vld [vmem:[%s1539 + $0x98] sm:$0xff]
      %v1560 = vld [vmem:[%s1539 + $0xa0] sm:$0xff]
      %v1561 = vld [vmem:[%s1539 + $0xa8] sm:$0xff]
      %v1562 = vld [vmem:[%s1539 + $0xb0] sm:$0xff]
      %v1563 = vld [vmem:[%s1539 + $0xb8] sm:$0xff]
      %v1564 = vld [vmem:[%s1539 + $0xc0] sm:$0xff]
      %v1565 = vld [vmem:[%s1539 + $0xc8] sm:$0xff]
      %v1566 = vld [vmem:[%s1539 + $0xd0] sm:$0xff]
      %v1567 = vld [vmem:[%s1539 + $0xd8] sm:$0xff]
      %v1568 = vld [vmem:[%s1539 + $0xe0] sm:$0xff]
      %v1569 = vld [vmem:[%s1539 + $0xe8] sm:$0xff]
      %v1570 = vld [vmem:[%s1539 + $0xf0] sm:$0xff]
      %v1571 = vld [vmem:[%s1539 + $0xf8] sm:$0xff]
      %vm1576 = vcmask 1045504
      %v1577 = vrot.slane %v1535, 2
      %v1578 = vrot.slane %v1368, 2
      %v1579 = vsel %vm1576, %v1577, %v1578
      %v1580 = vrot.slane %v1536, 2
      %v1581 = vrot.slane %v1369, 2
      %v1582 = vsel %vm1576, %v1580, %v1581
      %v1583 = vrot.slane %v1370, 2
      %v1584 = vsel %vm1576, %v1578, %v1583
      %v1585 = vrot.slane %v1371, 2
      %v1586 = vsel %vm1576, %v1581, %v1585
      %v1587 = vrot.slane %v1372, 2
      %v1588 = vsel %vm1576, %v1583, %v1587
      %v1589 = vrot.slane %v1373, 2
      %v1590 = vsel %vm1576, %v1585, %v1589
      %v1591 = vrot.slane %v1537, 2
      %v1592 = vsel %vm1576, %v1587, %v1591
      %v1593 = vrot.slane %v1538, 2
      %v1594 = vsel %vm1576, %v1589, %v1593
      %1603 = vmatprep.subr.mxu0 0.0
      %1604 = vmatpush1.msra.mxu0 %v1540
      %1605 = vmatprep.subr.mxu0 0.0
      %1606 = vmatpush1.msra.mxu0 %v1541
      %1607 = vmatprep.subr.mxu0 0.0
      %1608 = vmatpush1.msra.mxu0 %v1542
      %1609 = vmatprep.subr.mxu0 0.0
      %1610 = vmatpush1.msra.mxu0 %v1543
      %1611 = vmatprep.subr.mxu0 0.0
      %1612 = vmatpush1.msra.mxu0 %v1544
      %1613 = vmatprep.subr.mxu0 0.0
      %1614 = vmatpush1.msra.mxu0 %v1545
      %1615 = vmatprep.subr.mxu0 0.0
      %1616 = vmatpush1.msra.mxu0 %v1546
      %1617 = vmatprep.subr.mxu0 0.0
      %1618 = vmatpush1.msra.mxu0 %v1547
      %1619 = vmatprep.subr.mxu0 0.0
      %1620 = vmatpush1.msra.mxu0 %v1548
      %1621 = vmatprep.subr.mxu0 0.0
      %1622 = vmatpush1.msra.mxu0 %v1549
      %1623 = vmatprep.subr.mxu0 0.0
      %1624 = vmatpush1.msra.mxu0 %v1550
      %1625 = vmatprep.subr.mxu0 0.0
      %1626 = vmatpush1.msra.mxu0 %v1551
      %1627 = vmatprep.subr.mxu0 0.0
      %1628 = vmatpush1.msra.mxu0 %v1552
      %1629 = vmatprep.subr.mxu0 0.0
      %1630 = vmatpush1.msra.mxu0 %v1553
      %1631 = vmatprep.subr.mxu0 0.0
      %1632 = vmatpush1.msra.mxu0 %v1554
      %1633 = vmatprep.subr.mxu0 0.0
      %1634 = vmatpush1.msra.mxu0 %v1555
      %1635 = vmatprep.subr.mxu0 0.0
      %1636 = vmatpush1.msra.mxu0 %v1556
      %1637 = vmatprep.subr.mxu0 0.0
      %1638 = vmatpush1.msra.mxu0 %v1557
      %1639 = vmatprep.subr.mxu0 0.0
      %1640 = vmatpush1.msra.mxu0 %v1558
      %1641 = vmatprep.subr.mxu0 0.0
      %1642 = vmatpush1.msra.mxu0 %v1559
      %1643 = vmatprep.subr.mxu0 0.0
      %1644 = vmatpush1.msra.mxu0 %v1560
      %1645 = vmatprep.subr.mxu0 0.0
      %1646 = vmatpush1.msra.mxu0 %v1561
      %1647 = vmatprep.subr.mxu0 0.0
      %1648 = vmatpush1.msra.mxu0 %v1562
      %1649 = vmatprep.subr.mxu0 0.0
      %1650 = vmatpush1.msra.mxu0 %v1563
      %1651 = vmatprep.subr.mxu0 0.0
      %1652 = vmatpush1.msra.mxu0 %v1564
      %1653 = vmatprep.subr.mxu0 0.0
      %1654 = vmatpush1.msra.mxu0 %v1565
      %1655 = vmatprep.subr.mxu0 0.0
      %1656 = vmatpush1.msra.mxu0 %v1566
      %1657 = vmatprep.subr.mxu0 0.0
      %1658 = vmatpush1.msra.mxu0 %v1567
      %1659 = vmatprep.subr.mxu0 0.0
      %1660 = vmatpush1.msra.mxu0 %v1568
      %1661 = vmatprep.subr.mxu0 0.0
      %1662 = vmatpush1.msra.mxu0 %v1569
      %1663 = vmatprep.subr.mxu0 0.0
      %1664 = vmatpush1.msra.mxu0 %v1570
      %1665 = vmatprep.subr.mxu0 0.0
      %1666 = vmatpush1.msra.mxu0 %v1571
      %1667 = vmatprep.mubr.f32.mxu0 %v1582
      %1668 = vmatmul.mubr.f32.gmra.mrb[0].mxu0 %v1579
      %v1669 = vpop.f32.mrb[0].mxu0
      %v1670 = vadd.f32 0.0, %v1669
      %v1671 = vpop.f32.mrb[0].mxu0
      %1672 = vmatprep.mubr.f32.mxu0 %v1586
      %1673 = vmatmul.mubr.f32.gmra.mrb[0].mxu0 %v1584
      %v1674 = vpop.f32.mrb[0].mxu0
      %v1675 = vadd.f32 0.0, %v1674
      %v1676 = vpop.f32.mrb[0].mxu0
      %1677 = vmatprep.mubr.f32.mxu0 %v1590
      %1678 = vmatmul.mubr.f32.gmra.mrb[0].mxu0 %v1588
      %v1679 = vpop.f32.mrb[0].mxu0
      %v1680 = vadd.f32 0.0, %v1679
      %v1681 = vpop.f32.mrb[0].mxu0
      %1682 = vmatprep.mubr.f32.mxu0 %v1594
      %1683 = vmatmul.mubr.f32.gmra.mrb[0].mxu0 %v1592
      %v1684 = vpop.f32.mrb[0].mxu0
      %v1685 = vadd.f32 0.0, %v1684
      %v1686 = vpop.f32.mrb[0].mxu0
      %1687 = vdwg.mxu0
      %v1688 = vadd.f32 %v1531, %v1670
      %v1689 = vadd.f32 %v1532, %v1675
      %v1690 = vadd.f32 %v1533, %v1680
      %v1691 = vadd.f32 %v1534, %v1685
      %1692 = vst [vmem:[%s379] sm:$0xff] %v1688
      %1693 = vst [vmem:[%s379 + $0x8] sm:$0xff] %v1689
      %1694 = vst [vmem:[%s379 + $0x10] sm:$0xff] %v1690
      %1695 = vst [vmem:[%s379 + $0x18] sm:$0xff] %v1691
      %p1696 = scmp.lt.s32.totalorder %s21, 1
      %s1697 = scalar_select %p1696, %s21, 1
      %s1698 = smul.addr %s1697, 4
      %s1699 = smul.addr %s1698, 8
      %s1700 = scalar_lea.vmem %s10, %s1699
      // Predicated region
      $region61: #{upde_forward.1} parent=59 // pred_check
        %p1701 = pneg %p259
      $region62: #{upde_forward.1} parent=59 // pred_check_branch
        %1703 = sbr.rel (%p1701) target = $region64
      $region63: #{upde_forward.1} parent=59 // pred_region
        _
      $region64: #{upde_forward.1} parent=59 // pred_fallthru
        _
    $region60: #{upde_forward.1} parent=5 // pred_fallthru
      _
    %p1704 = scmp.le.s32.totalorder 2, %s16
    // Predicated region
    $region65: #{upde_forward.1} parent=5 // pred_check
      %p1705 = pneg %p1704
    $region66: #{upde_forward.1} parent=5 // pred_check_branch
      %1707 = sbr.rel (%p1705) target = $region68
    $region67: #{upde_forward.1} parent=5 // pred_region
      %s1708 = ssub.s32 %s16, 2
      // Predicated region
      $region69: #{upde_forward.1} parent=67 // pred_check
        %p1709 = pneg %p265
      $region70: #{upde_forward.1} parent=67 // pred_check_branch
        %1711 = sbr.rel (%p1709) target = $region72
      $region71: #{upde_forward.1} parent=67 // pred_region
        %p1712 = scmp.lt.s32.totalorder %s22, 1
        %s1713 = scalar_select %p1712, %s22, 1
        %s1714 = smul.addr %s1713, 4
        %s1715 = smul.addr %s1714, 8
        %s1716 = scalar_lea.vmem %s10, %s1715
      $region72: #{upde_forward.1} parent=67 // pred_fallthru
        _
    $region68: #{upde_forward.1} parent=5 // pred_fallthru
      _
  $region6: #{upde_forward.1} parent=0 // loop_footer
    %s20 = sadd.s32 1, %s16
  $region7: #{upde_forward.1} parent=0 // loop_footer_branch
    %15 = sbr.rel target = $region3
  $region8: #{upde_forward.1} parent=0 // loop_exit
    _

</llo_original>
